<compile_context>
chip_gen: v6e
topology: v6e:2x2x1
jax: 0.10.0
libtpu: 0.0.40
codegen_flags: <defaults>
</compile_context>

<pallas_src>
import functools

import numpy as np

import jax
import jax.numpy as jnp
from jax.experimental import pallas as pl
from jax.experimental.pallas import tpu as pltpu

EPS = 1e-5  # BatchNorm2d default eps


# ----------------------------------------------------------------------------
# The fused Pallas kernel (single VMEM-resident pass, lane-dense layout)
# ----------------------------------------------------------------------------
def _resblock_kernel(x_ref, g1_ref, g2_ref,
                     bn1w_ref, bn1b_ref, bn2w_ref, bn2b_ref,
                     q1_ref, q2_ref,
                     w1_ref, b1_ref, w2_ref, b2_ref,
                     skw_ref, skb_ref,
                     o_ref, *, N, H, W, batchnorm, skip_conv):
    """PreActResBlock: [ABN1]->relu->conv1->[ABN2]->relu->conv2 (+skip), fused.

    Activations are (N*H, W*C) slabs (lane-dense).  Convs are banded-weight matmuls
    with 128-wide outputs; BN is a folded per-sample scale/shift.
    """
    rows = N * H
    inv_cnt = 1.0 / float(rows * W)              # 1/(N*H*W) for BN batch stats
    xs = x_ref[...].astype(jnp.float32)          # (rows, W*Cin)

    # ---- skip path: 1x1 conv as a block-diagonal (W*Cin, W*Cout) matmul ----
    if skip_conv:
        skip = jnp.dot(xs.astype(jnp.bfloat16), skw_ref[...],
                       preferred_element_type=jnp.float32) + skb_ref[...]
    else:
        skip = xs                                # Cin == Cout

    def adaptive_bn(h, gamma_w, bnw_w, bnb_w, q_ref):
        # Folded AdaptiveBN (training mode): y = h*scale_n + shift_n, 2 VPU ops/elem.
        s1 = jnp.sum(h, axis=0, keepdims=True)           # (1, W*C) per-(w,c) sums
        s2 = jnp.sum(h * h, axis=0, keepdims=True)
        q = q_ref[...]                                    # same-channel indicator
        mean_w = jnp.dot(s1, q, preferred_element_type=jnp.float32) * inv_cnt
        ex2_w = jnp.dot(s2, q, preferred_element_type=jnp.float32) * inv_cnt
        a = bnw_w * jax.lax.rsqrt(ex2_w - mean_w * mean_w + EPS)   # (1, W*C)
        scale = a * gamma_w                               # (N, W*C)
        shift = (bnb_w - mean_w * a) * gamma_w            # (N, W*C)
        h3 = h.reshape(N, H, h.shape[-1])
        h3 = h3 * scale[:, None, :] + shift[:, None, :]
        return h3.reshape(rows, h.shape[-1])

    def conv3x3(h, w_ref, b_wide):
        # Banded 3x3 conv: 3 row-shifted slabs x 3 banded weights -> one f32 result.
        # W-direction zero padding is implicit (zeros) in the banded weights; the
        # H-direction padding is the zero row + per-sample boundary masks below.
        row_id = jax.lax.broadcasted_iota(jnp.int32, h.shape, 0)
        zrow = jnp.zeros((1, h.shape[-1]), jnp.float32)
        h_up = jnp.concatenate([zrow, h[:rows - 1, :]], axis=0)    # row r <- h[r-1]
        h_dn = jnp.concatenate([h[1:, :], zrow], axis=0)           # row r <- h[r+1]
        h_up = jnp.where(row_id % H == 0, 0.0, h_up)               # sample top edge
        h_dn = jnp.where(row_id % H == H - 1, 0.0, h_dn)           # sample bottom edge
        acc = jnp.dot(h.astype(jnp.bfloat16), w_ref[1],
                      preferred_element_type=jnp.float32)
        acc = acc + jnp.dot(h_up.astype(jnp.bfloat16), w_ref[0],
                            preferred_element_type=jnp.float32)
        acc = acc + jnp.dot(h_dn.astype(jnp.bfloat16), w_ref[2],
                            preferred_element_type=jnp.float32)
        return acc + b_wide

    # ---- main path ----
    h = xs
    if batchnorm:
        h = adaptive_bn(h, g1_ref[...], bn1w_ref[...], bn1b_ref[...], q1_ref)
    h = jnp.maximum(h, 0.0)
    h = conv3x3(h, w1_ref, b1_ref[...])                   # (rows, W*Cout)
    if batchnorm:
        h = adaptive_bn(h, g2_ref[...], bn2w_ref[...], bn2b_ref[...], q2_ref)
    h = jnp.maximum(h, 0.0)
    out = conv3x3(h, w2_ref, b2_ref[...]) + skip

    # Lane-dense (rows, W*Cout) store; minor dim = 128 for the demo shape.
    o_ref[...] = out.astype(o_ref.dtype)


# ----------------------------------------------------------------------------
# Parameter setup (plain JAX / numpy glue, done once)
# ----------------------------------------------------------------------------
def spectral_normalize(w, n_iter=30):
    """Divide weight by its largest singular value (torch spectral_norm effect)."""
    mat = w.reshape(w.shape[0], -1).astype(jnp.float32)
    u = jnp.full((mat.shape[0],), 1.0 / jnp.sqrt(mat.shape[0]), jnp.float32)
    v = None
    for _ in range(n_iter):
        v = mat.T @ u
        v = v / (jnp.linalg.norm(v) + 1e-12)
        u = mat @ v
        u = u / (jnp.linalg.norm(u) + 1e-12)
    sigma = u @ (mat @ v)
    return w / sigma


def _banded_conv_weights(k_hwio, width):
    """(3,3,Cin,Cout) kernel -> 3 banded (W*Cin, W*Cout) matrices (one per kernel row).

    band[dh][c*Cin+ci, w*Cout+co] = k[dh, c-w+1, ci, co] for |c-w| <= 1, else 0.
    Zero entries at w=0 / w=W-1 encode the conv's W-direction zero padding.
    """
    kh = np.asarray(k_hwio, np.float32)
    _, _, cin, cout = kh.shape
    bands = np.zeros((3, width * cin, width * cout), np.float32)
    for dh in range(3):
        for w in range(width):
            for dw in range(3):
                c = w + dw - 1
                if 0 <= c < width:
                    bands[dh, c * cin:(c + 1) * cin, w * cout:(w + 1) * cout] = kh[dh, dw]
    return bands


def _blockdiag_1x1(k_io, width):
    """(Cin, Cout) 1x1-conv weight -> block-diagonal (W*Cin, W*Cout) matrix."""
    kio = np.asarray(k_io, np.float32)
    cin, cout = kio.shape
    blk = np.zeros((width * cin, width * cout), np.float32)
    for w in range(width):
        blk[w * cin:(w + 1) * cin, w * cout:(w + 1) * cout] = kio
    return blk


def _channel_indicator(c, width):
    """(W*C, W*C) 0/1 matrix: Q[i,j] = 1 iff lanes i and j hold the same channel."""
    lane = np.arange(width * c)
    return (lane[:, None] % c == lane[None, :] % c).astype(np.float32)


def make_params(key, cin, cout, e, width):
    ks = jax.random.split(key, 14)
    rnd = lambda k, shape, s=0.3: s * jax.random.normal(k, shape, jnp.float32)

    skip_k = np.asarray(spectral_normalize(rnd(ks[0], (cout, cin, 1, 1)))) \
        .reshape(cout, cin).T                                   # (cin, cout)
    conv1_k = np.asarray(spectral_normalize(rnd(ks[1], (cout, cin, 3, 3)))) \
        .transpose(2, 3, 1, 0)                                  # (3,3,cin,cout)
    conv2_k = np.asarray(spectral_normalize(rnd(ks[2], (cout, cout, 3, 3)))) \
        .transpose(2, 3, 1, 0)
    g1_w = spectral_normalize(rnd(ks[3], (cin, e)))
    g2_w = spectral_normalize(rnd(ks[4], (cout, e)))

    return {
        # Kernel-ready MXU operands (bf16, banded / block-diag, specialised to `width`).
        "conv1_w": jnp.asarray(_banded_conv_weights(conv1_k, width), jnp.bfloat16),
        "conv2_w": jnp.asarray(_banded_conv_weights(conv2_k, width), jnp.bfloat16),
        "skip_w": jnp.asarray(_blockdiag_1x1(skip_k, width), jnp.bfloat16),
        "q_in": jnp.asarray(_channel_indicator(cin, width)),
        "q_out": jnp.asarray(_channel_indicator(cout, width)),
        # Raw copies for the pure-JAX reference (same bf16 rounding as the banded ones).
        "conv1_k": jnp.asarray(conv1_k, jnp.bfloat16),
        "conv2_k": jnp.asarray(conv2_k, jnp.bfloat16),
        "skip_k": jnp.asarray(skip_k, jnp.bfloat16),
        # Channel-minor (f32) biases / BN / gamma-Linear params (widened in wrapper).
        "conv1_b": rnd(ks[5], (1, cout), 0.1),
        "conv2_b": rnd(ks[6], (1, cout), 0.1),
        "skip_b": rnd(ks[7], (1, cout), 0.1),
        "g1_w": g1_w.T, "g1_b": rnd(ks[8], (1, cin), 0.1),      # (e,cin), (1,cin)
        "g2_w": g2_w.T, "g2_b": rnd(ks[9], (1, cout), 0.1),     # (e,cout), (1,cout)
        "bn1_w": 1.0 + rnd(ks[10], (1, cin), 0.1), "bn1_b": rnd(ks[11], (1, cin), 0.1),
        "bn2_w": 1.0 + rnd(ks[12], (1, cout), 0.1), "bn2_b": rnd(ks[13], (1, cout), 0.1),
    }


# ----------------------------------------------------------------------------
# PreActResBlock forward (single fused pallas_call)
# ----------------------------------------------------------------------------
def preact_resblock_forward(params, x_nchw, embeds=None, *, in_channels, out_channels,
                            batchnorm=False, upsample=False, downsample=False):
    if batchnorm and embeds is None:
        raise ValueError("PreActResBlock with batchnorm=True requires `embeds`.")

    # TODO(synk): at production sizes keep the surrounding model NHWC end-to-end (or fold
    #   the relayout into the kernel) so this transpose is not an extra HBM round trip.
    x = jnp.transpose(x_nchw, (0, 2, 3, 1)).astype(jnp.float32)      # NCHW -> NHWC
    if upsample:
        # TODO(synk): nn.Upsample(nearest, x2) left as XLA layout glue (unused in demo).
        x = jnp.repeat(jnp.repeat(x, 2, axis=1), 2, axis=2)
    N, H, W, _ = x.shape
    skip_conv = in_channels != out_channels

    # Lane-dense activation slab: rows = N*H, lanes = W*Cin.
    x_slab = x.reshape(N * H, W * in_channels)

    # Hoisted out of the kernel: tiny gamma Linears + lane-dense widening of all
    # per-channel parameters (tile channel-minor (.,C) -> (., W*C)).
    wide = lambda p: jnp.tile(p, (1, W))
    if batchnorm:
        emb = embeds.astype(jnp.float32)
        gamma1_w = wide(emb @ params["g1_w"] + params["g1_b"])       # (N, W*Cin)
        gamma2_w = wide(emb @ params["g2_w"] + params["g2_b"])       # (N, W*Cout)
        bn1w_w, bn1b_w = wide(params["bn1_w"]), wide(params["bn1_b"])
        bn2w_w, bn2b_w = wide(params["bn2_w"]), wide(params["bn2_b"])
        q1, q2 = params["q_in"], params["q_out"]
    else:
        gamma1_w = jnp.ones((N, W * in_channels), jnp.float32)
        gamma2_w = jnp.ones((N, W * out_channels), jnp.float32)
        bn1w_w = bn1b_w = jnp.zeros((1, W * in_channels), jnp.float32)
        bn2w_w = bn2b_w = jnp.zeros((1, W * out_channels), jnp.float32)
        q1 = jnp.zeros((W * in_channels, W * in_channels), jnp.float32)
        q2 = jnp.zeros((W * out_channels, W * out_channels), jnp.float32)
    b1_w, b2_w = wide(params["conv1_b"]), wide(params["conv2_b"])
    if skip_conv:
        skw, skb_w = params["skip_w"], wide(params["skip_b"])
    else:
        skw = jnp.zeros((8, 128), jnp.bfloat16)                      # unused placeholder
        skb_w = jnp.zeros((1, 128), jnp.float32)

    kernel = functools.partial(_resblock_kernel, N=N, H=H, W=W,
                               batchnorm=batchnorm, skip_conv=skip_conv)
    args = (x_slab, gamma1_w, gamma2_w, bn1w_w, bn1b_w, bn2w_w, bn2b_w, q1, q2,
            params["conv1_w"], b1_w, params["conv2_w"], b2_w, skw, skb_w)

    out2d = pl.pallas_call(
        kernel,
        out_shape=jax.ShapeDtypeStruct((N * H, W * out_channels), jnp.float32),
        in_specs=[pl.BlockSpec(memory_space=pltpu.MemorySpace.VMEM)] * len(args),
        out_specs=pl.BlockSpec(memory_space=pltpu.MemorySpace.VMEM),
    )(*args)

    out = out2d.reshape(N, H, W, out_channels)
    if downsample:
        # TODO(synk): nn.AvgPool2d(2) left as XLA glue (unused in demo).
        out = out.reshape(N, H // 2, 2, W // 2, 2, out_channels).mean(axis=(2, 4))
    return jnp.transpose(out, (0, 3, 1, 2))                          # NHWC -> NCHW


# ----------------------------------------------------------------------------
# Pure-JAX reference (same math & precision, different op structure, no Pallas)
# ----------------------------------------------------------------------------
def reference_forward(params, x_nchw, embeds, *, in_channels, out_channels,
                      batchnorm, upsample, downsample):
    x = jnp.transpose(x_nchw, (0, 2, 3, 1)).astype(jnp.float32)
    if upsample:
        x = jnp.repeat(jnp.repeat(x, 2, axis=1), 2, axis=2)
    N, H, W, _ = x.shape

    def conv3x3_relu(h, k_hwio, b):
        hp = jnp.pad(jnp.maximum(h, 0.0), ((0, 0), (1, 1), (1, 1), (0, 0)))
        acc = 0.0
        for dh in range(3):
            for dw in range(3):
                acc = acc + jnp.einsum(
                    "nhwi,io->nhwo",
                    hp[:, dh:dh + H, dw:dw + W, :].astype(jnp.bfloat16),
                    k_hwio[dh, dw], preferred_element_type=jnp.float32)
        return acc + b

    def abn(h, gw, gb, bnw, bnb):
        mean = h.mean(axis=(0, 1, 2), keepdims=True)
        var = ((h - mean) ** 2).mean(axis=(0, 1, 2), keepdims=True)
        y = (h - mean) * jax.lax.rsqrt(var + EPS) * bnw + bnb
        gamma = embeds @ gw + gb
        return y * gamma[:, None, None, :]

    if in_channels != out_channels:
        skip = jnp.einsum("nhwi,io->nhwo", x.astype(jnp.bfloat16), params["skip_k"],
                          preferred_element_type=jnp.float32) + params["skip_b"]
    else:
        skip = x
    h = x
    if batchnorm:
        h = abn(h, params["g1_w"], params["g1_b"], params["bn1_w"], params["bn1_b"])
    h = conv3x3_relu(h, params["conv1_k"], params["conv1_b"])
    if batchnorm:
        h = abn(h, params["g2_w"], params["g2_b"], params["bn2_w"], params["bn2_b"])
    out = conv3x3_relu(h, params["conv2_k"], params["conv2_b"]) + skip
    if downsample:
        out = out.reshape(N, H // 2, 2, W // 2, 2, out_channels).mean(axis=(2, 4))
    return jnp.transpose(out, (0, 3, 1, 2))


# ----------------------------------------------------------------------------
if __name__ == "__main__":
    N, CIN, COUT, E, HW = 2, 4, 8, 16, 16
    cfg = dict(in_channels=CIN, out_channels=COUT,
               batchnorm=True, upsample=False, downsample=False)

    key = jax.random.PRNGKey(0)
    k_p, k_x, k_e = jax.random.split(key, 3)
    params = make_params(k_p, CIN, COUT, E, HW)
    x = jax.random.normal(k_x, (N, CIN, HW, HW), jnp.float32)        # NCHW input
    embeds = jax.random.normal(k_e, (N, E), jnp.float32)

    fwd = jax.jit(functools.partial(preact_resblock_forward, **cfg))
    out = jax.block_until_ready(fwd(params, x, embeds))

    ref = jax.block_until_ready(reference_forward(params, x, embeds, **cfg))
    assert out.shape == (N, COUT, HW, HW), out.shape
    assert jnp.allclose(out, ref, rtol=1e-2, atol=1e-2), \
        float(jnp.max(jnp.abs(out - ref)))

    print("KERNEL_OK")
</pallas_src>

<mosaic_0001>
module attributes {stable_mosaic.version = 11 : i64} {
  func.func @_resblock_kernel(%arg0: memref<32x64xf32, #tpu.memory_space<vmem>>, %arg1: memref<2x64xf32, #tpu.memory_space<vmem>>, %arg2: memref<2x128xf32, #tpu.memory_space<vmem>>, %arg3: memref<1x64xf32, #tpu.memory_space<vmem>>, %arg4: memref<1x64xf32, #tpu.memory_space<vmem>>, %arg5: memref<1x128xf32, #tpu.memory_space<vmem>>, %arg6: memref<1x128xf32, #tpu.memory_space<vmem>>, %arg7: memref<64x64xf32, #tpu.memory_space<vmem>>, %arg8: memref<128x128xf32, #tpu.memory_space<vmem>>, %arg9: memref<3x64x128xbf16, #tpu.memory_space<vmem>>, %arg10: memref<1x128xf32, #tpu.memory_space<vmem>>, %arg11: memref<3x128x128xbf16, #tpu.memory_space<vmem>>, %arg12: memref<1x128xf32, #tpu.memory_space<vmem>>, %arg13: memref<64x128xbf16, #tpu.memory_space<vmem>>, %arg14: memref<1x128xf32, #tpu.memory_space<vmem>>, %arg15: memref<32x128xf32, #tpu.memory_space<vmem>>) attributes {dimension_semantics = [], scalar_prefetch = 0 : i64, scratch_operands = 0 : i64, tpu.core_type = #tpu.core_type<tc>} {
    %c0 = arith.constant 0 : index
    %c0_0 = arith.constant 0 : index
    %0 = vector.load %arg0[%c0, %c0_0] : memref<32x64xf32, #tpu.memory_space<vmem>>, vector<32x64xf32>
    %1 = arith.truncf %0 : vector<32x64xf32> to vector<32x64xbf16>
    %c0_1 = arith.constant 0 : index
    %c0_2 = arith.constant 0 : index
    %2 = vector.load %arg13[%c0_1, %c0_2] : memref<64x128xbf16, #tpu.memory_space<vmem>>, vector<64x128xbf16>
    %cst = arith.constant dense<0.000000e+00> : vector<32x128xf32>
    %3 = tpu.matmul %1, %2, %cst {dimension_numbers = #tpu.dot_dimension_numbers<[1], [0], [0], [1], [0, 0, 1, 1], [], []>} : vector<32x64xbf16>, vector<64x128xbf16>, vector<32x128xf32> -> vector<32x128xf32>
    %c0_3 = arith.constant 0 : index
    %c0_4 = arith.constant 0 : index
    %4 = vector.load %arg14[%c0_3, %c0_4] : memref<1x128xf32, #tpu.memory_space<vmem>>, vector<1x128xf32>
    %5 = vector.broadcast %4 : vector<1x128xf32> to vector<32x128xf32>
    %6 = arith.addf %3, %5 : vector<32x128xf32>
    %c0_5 = arith.constant 0 : index
    %c0_6 = arith.constant 0 : index
    %7 = vector.load %arg1[%c0_5, %c0_6] : memref<2x64xf32, #tpu.memory_space<vmem>>, vector<2x64xf32>
    %c0_7 = arith.constant 0 : index
    %c0_8 = arith.constant 0 : index
    %8 = vector.load %arg3[%c0_7, %c0_8] : memref<1x64xf32, #tpu.memory_space<vmem>>, vector<1x64xf32>
    %c0_9 = arith.constant 0 : index
    %c0_10 = arith.constant 0 : index
    %9 = vector.load %arg4[%c0_9, %c0_10] : memref<1x64xf32, #tpu.memory_space<vmem>>, vector<1x64xf32>
    %cst_11 = arith.constant dense<0.000000e+00> : vector<64xf32>
    %10 = vector.multi_reduction <add>, %0, %cst_11 [0] : vector<32x64xf32> to vector<64xf32>
    %11 = vector.shape_cast %10 : vector<64xf32> to vector<1x64xf32>
    %12 = arith.mulf %0, %0 : vector<32x64xf32>
    %cst_12 = arith.constant dense<0.000000e+00> : vector<64xf32>
    %13 = vector.multi_reduction <add>, %12, %cst_12 [0] : vector<32x64xf32> to vector<64xf32>
    %14 = vector.shape_cast %13 : vector<64xf32> to vector<1x64xf32>
    %c0_13 = arith.constant 0 : index
    %c0_14 = arith.constant 0 : index
    %15 = vector.load %arg7[%c0_13, %c0_14] : memref<64x64xf32, #tpu.memory_space<vmem>>, vector<64x64xf32>
    %cst_15 = arith.constant dense<0.000000e+00> : vector<1x64xf32>
    %16 = tpu.matmul %11, %15, %cst_15 {dimension_numbers = #tpu.dot_dimension_numbers<[1], [0], [0], [1], [0, 0, 1, 1], [], []>} : vector<1x64xf32>, vector<64x64xf32>, vector<1x64xf32> -> vector<1x64xf32>
    %cst_16 = arith.constant 0.001953125 : f32
    %17 = vector.broadcast %cst_16 : f32 to vector<1x64xf32>
    %18 = arith.mulf %16, %17 : vector<1x64xf32>
    %cst_17 = arith.constant dense<0.000000e+00> : vector<1x64xf32>
    %19 = tpu.matmul %14, %15, %cst_17 {dimension_numbers = #tpu.dot_dimension_numbers<[1], [0], [0], [1], [0, 0, 1, 1], [], []>} : vector<1x64xf32>, vector<64x64xf32>, vector<1x64xf32> -> vector<1x64xf32>
    %cst_18 = arith.constant 0.001953125 : f32
    %20 = vector.broadcast %cst_18 : f32 to vector<1x64xf32>
    %21 = arith.mulf %19, %20 : vector<1x64xf32>
    %22 = arith.mulf %18, %18 : vector<1x64xf32>
    %23 = arith.subf %21, %22 : vector<1x64xf32>
    %cst_19 = arith.constant 9.99999974E-6 : f32
    %24 = vector.broadcast %cst_19 : f32 to vector<1x64xf32>
    %25 = arith.addf %23, %24 : vector<1x64xf32>
    %26 = math.rsqrt %25 : vector<1x64xf32>
    %27 = arith.mulf %8, %26 : vector<1x64xf32>
    %28 = vector.broadcast %27 : vector<1x64xf32> to vector<2x64xf32>
    %29 = arith.mulf %28, %7 : vector<2x64xf32>
    %30 = arith.mulf %18, %27 : vector<1x64xf32>
    %31 = arith.subf %9, %30 : vector<1x64xf32>
    %32 = vector.broadcast %31 : vector<1x64xf32> to vector<2x64xf32>
    %33 = arith.mulf %32, %7 : vector<2x64xf32>
    %34 = vector.shape_cast %0 : vector<32x64xf32> to vector<2x16x64xf32>
    %35 = vector.shape_cast %29 : vector<2x64xf32> to vector<2x1x64xf32>
    %36 = vector.broadcast %35 : vector<2x1x64xf32> to vector<2x16x64xf32>
    %37 = arith.mulf %34, %36 : vector<2x16x64xf32>
    %38 = vector.shape_cast %33 : vector<2x64xf32> to vector<2x1x64xf32>
    %39 = vector.broadcast %38 : vector<2x1x64xf32> to vector<2x16x64xf32>
    %40 = arith.addf %37, %39 : vector<2x16x64xf32>
    %41 = vector.shape_cast %40 : vector<2x16x64xf32> to vector<32x64xf32>
    %cst_20 = arith.constant 0.000000e+00 : f32
    %42 = vector.broadcast %cst_20 : f32 to vector<32x64xf32>
    %43 = arith.maximumf %41, %42 : vector<32x64xf32>
    %c0_21 = arith.constant 0 : index
    %c0_22 = arith.constant 0 : index
    %44 = vector.load %arg10[%c0_21, %c0_22] : memref<1x128xf32, #tpu.memory_space<vmem>>, vector<1x128xf32>
    %45 = tpu.iota {dimensions = array<i32: 0>} : vector<32x64xi32>
    %cst_23 = arith.constant 0.000000e+00 : f32
    %46 = vector.broadcast %cst_23 : f32 to vector<1x64xf32>
    %47 = vector.extract_strided_slice %43 {offsets = [0, 0], sizes = [31, 64], strides = [1, 1]} : vector<32x64xf32> to vector<31x64xf32>
    %48 = tpu.concatenate %46, %47 in 0 : vector<1x64xf32>, vector<31x64xf32> -> vector<32x64xf32>
    %49 = vector.extract_strided_slice %43 {offsets = [1, 0], sizes = [31, 64], strides = [1, 1]} : vector<32x64xf32> to vector<31x64xf32>
    %50 = tpu.concatenate %49, %46 in 0 : vector<31x64xf32>, vector<1x64xf32> -> vector<32x64xf32>
    %c16_i32 = arith.constant 16 : i32
    %c0_i32 = arith.constant 0 : i32
    %51 = arith.cmpi eq, %c16_i32, %c0_i32 : i32
    %c1_i32 = arith.constant 1 : i32
    %52 = arith.select %51, %c1_i32, %c16_i32 : i32
    %53 = vector.broadcast %52 : i32 to vector<32x64xi32>
    %54 = arith.remsi %45, %53 : vector<32x64xi32>
    %c0_i32_24 = arith.constant 0 : i32
    %55 = vector.broadcast %c0_i32_24 : i32 to vector<32x64xi32>
    %56 = arith.cmpi ne, %54, %55 : vector<32x64xi32>
    %c0_i32_25 = arith.constant 0 : i32
    %57 = vector.broadcast %c0_i32_25 : i32 to vector<32x64xi32>
    %58 = arith.cmpi slt, %54, %57 : vector<32x64xi32>
    %c0_i32_26 = arith.constant 0 : i32
    %59 = arith.cmpi slt, %52, %c0_i32_26 : i32
    %60 = vector.broadcast %59 : i1 to vector<32x64xi1>
    %61 = vector.broadcast %60 : vector<32x64xi1> to vector<32x64xi1>
    %62 = arith.xori %58, %61 : vector<32x64xi1>
    %63 = arith.andi %62, %56 : vector<32x64xi1>
    %64 = vector.broadcast %52 : i32 to vector<32x64xi32>
    %65 = arith.addi %54, %64 : vector<32x64xi32>
    %66 = arith.select %63, %65, %54 : vector<32x64xi1>, vector<32x64xi32>
    %c0_i32_27 = arith.constant 0 : i32
    %67 = vector.broadcast %c0_i32_27 : i32 to vector<32x64xi32>
    %68 = arith.cmpi eq, %66, %67 : vector<32x64xi32>
    %cst_28 = arith.constant 0.000000e+00 : f32
    %69 = vector.broadcast %cst_28 : f32 to vector<32x64xf32>
    %70 = arith.select %68, %69, %48 : vector<32x64xi1>, vector<32x64xf32>
    %c16_i32_29 = arith.constant 16 : i32
    %c0_i32_30 = arith.constant 0 : i32
    %71 = arith.cmpi eq, %c16_i32_29, %c0_i32_30 : i32
    %c1_i32_31 = arith.constant 1 : i32
    %72 = arith.select %71, %c1_i32_31, %c16_i32_29 : i32
    %73 = vector.broadcast %72 : i32 to vector<32x64xi32>
    %74 = arith.remsi %45, %73 : vector<32x64xi32>
    %c0_i32_32 = arith.constant 0 : i32
    %75 = vector.broadcast %c0_i32_32 : i32 to vector<32x64xi32>
    %76 = arith.cmpi ne, %74, %75 : vector<32x64xi32>
    %c0_i32_33 = arith.constant 0 : i32
    %77 = vector.broadcast %c0_i32_33 : i32 to vector<32x64xi32>
    %78 = arith.cmpi slt, %74, %77 : vector<32x64xi32>
    %c0_i32_34 = arith.constant 0 : i32
    %79 = arith.cmpi slt, %72, %c0_i32_34 : i32
    %80 = vector.broadcast %79 : i1 to vector<32x64xi1>
    %81 = vector.broadcast %80 : vector<32x64xi1> to vector<32x64xi1>
    %82 = arith.xori %78, %81 : vector<32x64xi1>
    %83 = arith.andi %82, %76 : vector<32x64xi1>
    %84 = vector.broadcast %72 : i32 to vector<32x64xi32>
    %85 = arith.addi %74, %84 : vector<32x64xi32>
    %86 = arith.select %83, %85, %74 : vector<32x64xi1>, vector<32x64xi32>
    %c15_i32 = arith.constant 15 : i32
    %87 = vector.broadcast %c15_i32 : i32 to vector<32x64xi32>
    %88 = arith.cmpi eq, %86, %87 : vector<32x64xi32>
    %cst_35 = arith.constant 0.000000e+00 : f32
    %89 = vector.broadcast %cst_35 : f32 to vector<32x64xf32>
    %90 = arith.select %88, %89, %50 : vector<32x64xi1>, vector<32x64xf32>
    %91 = arith.truncf %43 : vector<32x64xf32> to vector<32x64xbf16>
    %c1 = arith.constant 1 : index
    %c0_36 = arith.constant 0 : index
    %c0_37 = arith.constant 0 : index
    %92 = vector.load %arg9[%c1, %c0_36, %c0_37] : memref<3x64x128xbf16, #tpu.memory_space<vmem>>, vector<1x64x128xbf16>
    %93 = vector.shape_cast %92 : vector<1x64x128xbf16> to vector<64x128xbf16>
    %cst_38 = arith.constant dense<0.000000e+00> : vector<32x128xf32>
    %94 = tpu.matmul %91, %93, %cst_38 {dimension_numbers = #tpu.dot_dimension_numbers<[1], [0], [0], [1], [0, 0, 1, 1], [], []>} : vector<32x64xbf16>, vector<64x128xbf16>, vector<32x128xf32> -> vector<32x128xf32>
    %95 = arith.truncf %70 : vector<32x64xf32> to vector<32x64xbf16>
    %c0_39 = arith.constant 0 : index
    %c0_40 = arith.constant 0 : index
    %c0_41 = arith.constant 0 : index
    %96 = vector.load %arg9[%c0_39, %c0_40, %c0_41] : memref<3x64x128xbf16, #tpu.memory_space<vmem>>, vector<1x64x128xbf16>
    %97 = vector.shape_cast %96 : vector<1x64x128xbf16> to vector<64x128xbf16>
    %cst_42 = arith.constant dense<0.000000e+00> : vector<32x128xf32>
    %98 = tpu.matmul %95, %97, %cst_42 {dimension_numbers = #tpu.dot_dimension_numbers<[1], [0], [0], [1], [0, 0, 1, 1], [], []>} : vector<32x64xbf16>, vector<64x128xbf16>, vector<32x128xf32> -> vector<32x128xf32>
    %99 = arith.addf %94, %98 : vector<32x128xf32>
    %100 = arith.truncf %90 : vector<32x64xf32> to vector<32x64xbf16>
    %c2 = arith.constant 2 : index
    %c0_43 = arith.constant 0 : index
    %c0_44 = arith.constant 0 : index
    %101 = vector.load %arg9[%c2, %c0_43, %c0_44] : memref<3x64x128xbf16, #tpu.memory_space<vmem>>, vector<1x64x128xbf16>
    %102 = vector.shape_cast %101 : vector<1x64x128xbf16> to vector<64x128xbf16>
    %cst_45 = arith.constant dense<0.000000e+00> : vector<32x128xf32>
    %103 = tpu.matmul %100, %102, %cst_45 {dimension_numbers = #tpu.dot_dimension_numbers<[1], [0], [0], [1], [0, 0, 1, 1], [], []>} : vector<32x64xbf16>, vector<64x128xbf16>, vector<32x128xf32> -> vector<32x128xf32>
    %104 = arith.addf %99, %103 : vector<32x128xf32>
    %105 = vector.broadcast %44 : vector<1x128xf32> to vector<32x128xf32>
    %106 = arith.addf %104, %105 : vector<32x128xf32>
    %c0_46 = arith.constant 0 : index
    %c0_47 = arith.constant 0 : index
    %107 = vector.load %arg2[%c0_46, %c0_47] : memref<2x128xf32, #tpu.memory_space<vmem>>, vector<2x128xf32>
    %c0_48 = arith.constant 0 : index
    %c0_49 = arith.constant 0 : index
    %108 = vector.load %arg5[%c0_48, %c0_49] : memref<1x128xf32, #tpu.memory_space<vmem>>, vector<1x128xf32>
    %c0_50 = arith.constant 0 : index
    %c0_51 = arith.constant 0 : index
    %109 = vector.load %arg6[%c0_50, %c0_51] : memref<1x128xf32, #tpu.memory_space<vmem>>, vector<1x128xf32>
    %cst_52 = arith.constant dense<0.000000e+00> : vector<128xf32>
    %110 = vector.multi_reduction <add>, %106, %cst_52 [0] : vector<32x128xf32> to vector<128xf32>
    %111 = vector.shape_cast %110 : vector<128xf32> to vector<1x128xf32>
    %112 = arith.mulf %106, %106 : vector<32x128xf32>
    %cst_53 = arith.constant dense<0.000000e+00> : vector<128xf32>
    %113 = vector.multi_reduction <add>, %112, %cst_53 [0] : vector<32x128xf32> to vector<128xf32>
    %114 = vector.shape_cast %113 : vector<128xf32> to vector<1x128xf32>
    %c0_54 = arith.constant 0 : index
    %c0_55 = arith.constant 0 : index
    %115 = vector.load %arg8[%c0_54, %c0_55] : memref<128x128xf32, #tpu.memory_space<vmem>>, vector<128x128xf32>
    %cst_56 = arith.constant dense<0.000000e+00> : vector<1x128xf32>
    %116 = tpu.matmul %111, %115, %cst_56 {dimension_numbers = #tpu.dot_dimension_numbers<[1], [0], [0], [1], [0, 0, 1, 1], [], []>} : vector<1x128xf32>, vector<128x128xf32>, vector<1x128xf32> -> vector<1x128xf32>
    %cst_57 = arith.constant 0.001953125 : f32
    %117 = vector.broadcast %cst_57 : f32 to vector<1x128xf32>
    %118 = arith.mulf %116, %117 : vector<1x128xf32>
    %cst_58 = arith.constant dense<0.000000e+00> : vector<1x128xf32>
    %119 = tpu.matmul %114, %115, %cst_58 {dimension_numbers = #tpu.dot_dimension_numbers<[1], [0], [0], [1], [0, 0, 1, 1], [], []>} : vector<1x128xf32>, vector<128x128xf32>, vector<1x128xf32> -> vector<1x128xf32>
    %cst_59 = arith.constant 0.001953125 : f32
    %120 = vector.broadcast %cst_59 : f32 to vector<1x128xf32>
    %121 = arith.mulf %119, %120 : vector<1x128xf32>
    %122 = arith.mulf %118, %118 : vector<1x128xf32>
    %123 = arith.subf %121, %122 : vector<1x128xf32>
    %cst_60 = arith.constant 9.99999974E-6 : f32
    %124 = vector.broadcast %cst_60 : f32 to vector<1x128xf32>
    %125 = arith.addf %123, %124 : vector<1x128xf32>
    %126 = math.rsqrt %125 : vector<1x128xf32>
    %127 = arith.mulf %108, %126 : vector<1x128xf32>
    %128 = vector.broadcast %127 : vector<1x128xf32> to vector<2x128xf32>
    %129 = arith.mulf %128, %107 : vector<2x128xf32>
    %130 = arith.mulf %118, %127 : vector<1x128xf32>
    %131 = arith.subf %109, %130 : vector<1x128xf32>
    %132 = vector.broadcast %131 : vector<1x128xf32> to vector<2x128xf32>
    %133 = arith.mulf %132, %107 : vector<2x128xf32>
    %134 = vector.shape_cast %106 : vector<32x128xf32> to vector<2x16x128xf32>
    %135 = vector.shape_cast %129 : vector<2x128xf32> to vector<2x1x128xf32>
    %136 = vector.broadcast %135 : vector<2x1x128xf32> to vector<2x16x128xf32>
    %137 = arith.mulf %134, %136 : vector<2x16x128xf32>
    %138 = vector.shape_cast %133 : vector<2x128xf32> to vector<2x1x128xf32>
    %139 = vector.broadcast %138 : vector<2x1x128xf32> to vector<2x16x128xf32>
    %140 = arith.addf %137, %139 : vector<2x16x128xf32>
    %141 = vector.shape_cast %140 : vector<2x16x128xf32> to vector<32x128xf32>
    %cst_61 = arith.constant 0.000000e+00 : f32
    %142 = vector.broadcast %cst_61 : f32 to vector<32x128xf32>
    %143 = arith.maximumf %141, %142 : vector<32x128xf32>
    %c0_62 = arith.constant 0 : index
    %c0_63 = arith.constant 0 : index
    %144 = vector.load %arg12[%c0_62, %c0_63] : memref<1x128xf32, #tpu.memory_space<vmem>>, vector<1x128xf32>
    %145 = tpu.iota {dimensions = array<i32: 0>} : vector<32x128xi32>
    %cst_64 = arith.constant 0.000000e+00 : f32
    %146 = vector.broadcast %cst_64 : f32 to vector<1x128xf32>
    %147 = vector.extract_strided_slice %143 {offsets = [0, 0], sizes = [31, 128], strides = [1, 1]} : vector<32x128xf32> to vector<31x128xf32>
    %148 = tpu.concatenate %146, %147 in 0 : vector<1x128xf32>, vector<31x128xf32> -> vector<32x128xf32>
    %149 = vector.extract_strided_slice %143 {offsets = [1, 0], sizes = [31, 128], strides = [1, 1]} : vector<32x128xf32> to vector<31x128xf32>
    %150 = tpu.concatenate %149, %146 in 0 : vector<31x128xf32>, vector<1x128xf32> -> vector<32x128xf32>
    %c16_i32_65 = arith.constant 16 : i32
    %c0_i32_66 = arith.constant 0 : i32
    %151 = arith.cmpi eq, %c16_i32_65, %c0_i32_66 : i32
    %c1_i32_67 = arith.constant 1 : i32
    %152 = arith.select %151, %c1_i32_67, %c16_i32_65 : i32
    %153 = vector.broadcast %152 : i32 to vector<32x128xi32>
    %154 = arith.remsi %145, %153 : vector<32x128xi32>
    %c0_i32_68 = arith.constant 0 : i32
    %155 = vector.broadcast %c0_i32_68 : i32 to vector<32x128xi32>
    %156 = arith.cmpi ne, %154, %155 : vector<32x128xi32>
    %c0_i32_69 = arith.constant 0 : i32
    %157 = vector.broadcast %c0_i32_69 : i32 to vector<32x128xi32>
    %158 = arith.cmpi slt, %154, %157 : vector<32x128xi32>
    %c0_i32_70 = arith.constant 0 : i32
    %159 = arith.cmpi slt, %152, %c0_i32_70 : i32
    %160 = vector.broadcast %159 : i1 to vector<32x128xi1>
    %161 = vector.broadcast %160 : vector<32x128xi1> to vector<32x128xi1>
    %162 = arith.xori %158, %161 : vector<32x128xi1>
    %163 = arith.andi %162, %156 : vector<32x128xi1>
    %164 = vector.broadcast %152 : i32 to vector<32x128xi32>
    %165 = arith.addi %154, %164 : vector<32x128xi32>
    %166 = arith.select %163, %165, %154 : vector<32x128xi1>, vector<32x128xi32>
    %c0_i32_71 = arith.constant 0 : i32
    %167 = vector.broadcast %c0_i32_71 : i32 to vector<32x128xi32>
    %168 = arith.cmpi eq, %166, %167 : vector<32x128xi32>
    %cst_72 = arith.constant 0.000000e+00 : f32
    %169 = vector.broadcast %cst_72 : f32 to vector<32x128xf32>
    %170 = arith.select %168, %169, %148 : vector<32x128xi1>, vector<32x128xf32>
    %c16_i32_73 = arith.constant 16 : i32
    %c0_i32_74 = arith.constant 0 : i32
    %171 = arith.cmpi eq, %c16_i32_73, %c0_i32_74 : i32
    %c1_i32_75 = arith.constant 1 : i32
    %172 = arith.select %171, %c1_i32_75, %c16_i32_73 : i32
    %173 = vector.broadcast %172 : i32 to vector<32x128xi32>
    %174 = arith.remsi %145, %173 : vector<32x128xi32>
    %c0_i32_76 = arith.constant 0 : i32
    %175 = vector.broadcast %c0_i32_76 : i32 to vector<32x128xi32>
    %176 = arith.cmpi ne, %174, %175 : vector<32x128xi32>
    %c0_i32_77 = arith.constant 0 : i32
    %177 = vector.broadcast %c0_i32_77 : i32 to vector<32x128xi32>
    %178 = arith.cmpi slt, %174, %177 : vector<32x128xi32>
    %c0_i32_78 = arith.constant 0 : i32
    %179 = arith.cmpi slt, %172, %c0_i32_78 : i32
    %180 = vector.broadcast %179 : i1 to vector<32x128xi1>
    %181 = vector.broadcast %180 : vector<32x128xi1> to vector<32x128xi1>
    %182 = arith.xori %178, %181 : vector<32x128xi1>
    %183 = arith.andi %182, %176 : vector<32x128xi1>
    %184 = vector.broadcast %172 : i32 to vector<32x128xi32>
    %185 = arith.addi %174, %184 : vector<32x128xi32>
    %186 = arith.select %183, %185, %174 : vector<32x128xi1>, vector<32x128xi32>
    %c15_i32_79 = arith.constant 15 : i32
    %187 = vector.broadcast %c15_i32_79 : i32 to vector<32x128xi32>
    %188 = arith.cmpi eq, %186, %187 : vector<32x128xi32>
    %cst_80 = arith.constant 0.000000e+00 : f32
    %189 = vector.broadcast %cst_80 : f32 to vector<32x128xf32>
    %190 = arith.select %188, %189, %150 : vector<32x128xi1>, vector<32x128xf32>
    %191 = arith.truncf %143 : vector<32x128xf32> to vector<32x128xbf16>
    %c1_81 = arith.constant 1 : index
    %c0_82 = arith.constant 0 : index
    %c0_83 = arith.constant 0 : index
    %192 = vector.load %arg11[%c1_81, %c0_82, %c0_83] : memref<3x128x128xbf16, #tpu.memory_space<vmem>>, vector<1x128x128xbf16>
    %193 = vector.shape_cast %192 : vector<1x128x128xbf16> to vector<128x128xbf16>
    %cst_84 = arith.constant dense<0.000000e+00> : vector<32x128xf32>
    %194 = tpu.matmul %191, %193, %cst_84 {dimension_numbers = #tpu.dot_dimension_numbers<[1], [0], [0], [1], [0, 0, 1, 1], [], []>} : vector<32x128xbf16>, vector<128x128xbf16>, vector<32x128xf32> -> vector<32x128xf32>
    %195 = arith.truncf %170 : vector<32x128xf32> to vector<32x128xbf16>
    %c0_85 = arith.constant 0 : index
    %c0_86 = arith.constant 0 : index
    %c0_87 = arith.constant 0 : index
    %196 = vector.load %arg11[%c0_85, %c0_86, %c0_87] : memref<3x128x128xbf16, #tpu.memory_space<vmem>>, vector<1x128x128xbf16>
    %197 = vector.shape_cast %196 : vector<1x128x128xbf16> to vector<128x128xbf16>
    %cst_88 = arith.constant dense<0.000000e+00> : vector<32x128xf32>
    %198 = tpu.matmul %195, %197, %cst_88 {dimension_numbers = #tpu.dot_dimension_numbers<[1], [0], [0], [1], [0, 0, 1, 1], [], []>} : vector<32x128xbf16>, vector<128x128xbf16>, vector<32x128xf32> -> vector<32x128xf32>
    %199 = arith.addf %194, %198 : vector<32x128xf32>
    %200 = arith.truncf %190 : vector<32x128xf32> to vector<32x128xbf16>
    %c2_89 = arith.constant 2 : index
    %c0_90 = arith.constant 0 : index
    %c0_91 = arith.constant 0 : index
    %201 = vector.load %arg11[%c2_89, %c0_90, %c0_91] : memref<3x128x128xbf16, #tpu.memory_space<vmem>>, vector<1x128x128xbf16>
    %202 = vector.shape_cast %201 : vector<1x128x128xbf16> to vector<128x128xbf16>
    %cst_92 = arith.constant dense<0.000000e+00> : vector<32x128xf32>
    %203 = tpu.matmul %200, %202, %cst_92 {dimension_numbers = #tpu.dot_dimension_numbers<[1], [0], [0], [1], [0, 0, 1, 1], [], []>} : vector<32x128xbf16>, vector<128x128xbf16>, vector<32x128xf32> -> vector<32x128xf32>
    %204 = arith.addf %199, %203 : vector<32x128xf32>
    %205 = vector.broadcast %144 : vector<1x128xf32> to vector<32x128xf32>
    %206 = arith.addf %204, %205 : vector<32x128xf32>
    %207 = arith.addf %206, %6 : vector<32x128xf32>
    %c0_93 = arith.constant 0 : index
    %c0_94 = arith.constant 0 : index
    %208 = vector.load %arg15[%c0_93, %c0_94] : memref<32x128xf32, #tpu.memory_space<vmem>>, vector<32x128xf32>
    tpu.vector_store %arg15[%c0_93, %c0_94], %207 {strides = array<i32>} : memref<32x128xf32, #tpu.memory_space<vmem>>, vector<32x128xf32>,
    return
  }
}

</mosaic_0001>

<llo_original>
// kernel: tile.54
$region0: #{tile.54}
  %s0 = inlined_call_operand.vmem [shape: f32[2,16,8], index: 0, kind: input, shape index: {}]
  %s1 = inlined_call_operand.vmem [shape: f32[2,128], index: 1, kind: output, shape index: {}]
  $region1: #{tile.54} parent=0
    #allocation0 [shape = 'u8[4096]{0}', space=vmem, size = 0x1000, scoped, tag = 'scoped mem for output reshape']
    %s2 = smov 3
    %v3 = vld [vmem:[%s0] ss:$16 sm:%s2]
    %vm4 = vcmask 64512
    %5 = vst.msk [vmem:[#allocation0] sm:$0x3] %vm4, %v3
    %s6 = scalar_lea.vmem %s0, 15
    %s7 = smov 3
    %v8 = vld [vmem:[%s6] ss:$16 sm:%s7]
    %9 = vrot.lane.b32.xlu0 %v8, 120
    %v10 = vpop.permute.xlu0 %9
    %vm11 = vcmask 1048512
    %12 = vst.msk [vmem:[#allocation0] sm:$0x3] %vm11, %v10
    %s13 = scalar_lea.vmem %s0, 14
    %s14 = smov 3
    %v15 = vld [vmem:[%s13] ss:$16 sm:%s14]
    %16 = vrot.lane.b32.xlu0 %v15, 112
    %v17 = vpop.permute.xlu0 %16
    %vm18 = vcmask 982912
    %19 = vst.msk [vmem:[#allocation0] sm:$0x3] %vm18, %v17
    %s20 = scalar_lea.vmem %s0, 13
    %s21 = smov 3
    %v22 = vld [vmem:[%s20] ss:$16 sm:%s21]
    %23 = vrot.lane.b32.xlu0 %v22, 104
    %v24 = vpop.permute.xlu0 %23
    %vm25 = vcmask 917312
    %26 = vst.msk [vmem:[#allocation0] sm:$0x3] %vm25, %v24
    %s27 = scalar_lea.vmem %s0, 12
    %s28 = smov 3
    %v29 = vld [vmem:[%s27] ss:$16 sm:%s28]
    %30 = vrot.lane.b32.xlu0 %v29, 96
    %v31 = vpop.permute.xlu0 %30
    %vm32 = vcmask 851712
    %33 = vst.msk [vmem:[#allocation0] sm:$0x3] %vm32, %v31
    %s34 = scalar_lea.vmem %s0, 11
    %s35 = smov 3
    %v36 = vld [vmem:[%s34] ss:$16 sm:%s35]
    %37 = vrot.lane.b32.xlu0 %v36, 88
    %v38 = vpop.permute.xlu0 %37
    %vm39 = vcmask 786112
    %40 = vst.msk [vmem:[#allocation0] sm:$0x3] %vm39, %v38
    %s41 = scalar_lea.vmem %s0, 10
    %s42 = smov 3
    %v43 = vld [vmem:[%s41] ss:$16 sm:%s42]
    %44 = vrot.lane.b32.xlu0 %v43, 80
    %v45 = vpop.permute.xlu0 %44
    %vm46 = vcmask 720512
    %47 = vst.msk [vmem:[#allocation0] sm:$0x3] %vm46, %v45
    %s48 = scalar_lea.vmem %s0, 9
    %s49 = smov 3
    %v50 = vld [vmem:[%s48] ss:$16 sm:%s49]
    %51 = vrot.lane.b32.xlu0 %v50, 72
    %v52 = vpop.permute.xlu0 %51
    %vm53 = vcmask 654912
    %54 = vst.msk [vmem:[#allocation0] sm:$0x3] %vm53, %v52
    %s55 = scalar_lea.vmem %s0, 8
    %s56 = smov 3
    %v57 = vld [vmem:[%s55] ss:$16 sm:%s56]
    %58 = vrot.lane.b32.xlu0 %v57, 64
    %v59 = vpop.permute.xlu0 %58
    %vm60 = vcmask 589312
    %61 = vst.msk [vmem:[#allocation0] sm:$0x3] %vm60, %v59
    %s62 = scalar_lea.vmem %s0, 7
    %s63 = smov 3
    %v64 = vld [vmem:[%s62] ss:$16 sm:%s63]
    %65 = vrot.lane.b32.xlu0 %v64, 56
    %v66 = vpop.permute.xlu0 %65
    %vm67 = vcmask 523712
    %68 = vst.msk [vmem:[#allocation0] sm:$0x3] %vm67, %v66
    %s69 = scalar_lea.vmem %s0, 6
    %s70 = smov 3
    %v71 = vld [vmem:[%s69] ss:$16 sm:%s70]
    %72 = vrot.lane.b32.xlu0 %v71, 48
    %v73 = vpop.permute.xlu0 %72
    %vm74 = vcmask 458112
    %75 = vst.msk [vmem:[#allocation0] sm:$0x3] %vm74, %v73
    %s76 = scalar_lea.vmem %s0, 5
    %s77 = smov 3
    %v78 = vld [vmem:[%s76] ss:$16 sm:%s77]
    %79 = vrot.lane.b32.xlu0 %v78, 40
    %v80 = vpop.permute.xlu0 %79
    %vm81 = vcmask 392512
    %82 = vst.msk [vmem:[#allocation0] sm:$0x3] %vm81, %v80
    %s83 = scalar_lea.vmem %s0, 4
    %s84 = smov 3
    %v85 = vld [vmem:[%s83] ss:$16 sm:%s84]
    %86 = vrot.lane.b32.xlu0 %v85, 32
    %v87 = vpop.permute.xlu0 %86
    %vm88 = vcmask 326912
    %89 = vst.msk [vmem:[#allocation0] sm:$0x3] %vm88, %v87
    %s90 = scalar_lea.vmem %s0, 3
    %s91 = smov 3
    %v92 = vld [vmem:[%s90] ss:$16 sm:%s91]
    %93 = vrot.lane.b32.xlu0 %v92, 24
    %v94 = vpop.permute.xlu0 %93
    %vm95 = vcmask 261312
    %96 = vst.msk [vmem:[#allocation0] sm:$0x3] %vm95, %v94
    %s97 = scalar_lea.vmem %s0, 2
    %s98 = smov 3
    %v99 = vld [vmem:[%s97] ss:$16 sm:%s98]
    %100 = vrot.lane.b32.xlu0 %v99, 16
    %v101 = vpop.permute.xlu0 %100
    %vm102 = vcmask 195712
    %103 = vst.msk [vmem:[#allocation0] sm:$0x3] %vm102, %v101
    %s104 = scalar_lea.vmem %s0, 1
    %s105 = smov 3
    %v106 = vld [vmem:[%s104] ss:$16 sm:%s105]
    %107 = vrot.lane.b32.xlu0 %v106, 8
    %v108 = vpop.permute.xlu0 %107
    %vm109 = vcmask 130112
    %110 = vst.msk [vmem:[#allocation0] sm:$0x3] %vm109, %v108
    %s112 = sshll.u32 1, 2
    %s113 = ssub.s32 %s112, 1
    %v115 = vld [vmem:[#allocation0] sm:%s113]
    %s116 = sshll.u32 1, 2
    %s117 = ssub.s32 %s116, 1
    %118 = vst [vmem:[%s1] sm:%s117] %v115

// kernel: tile.49
$region0: #{tile.49}
  %s0 = inlined_call_operand.vmem [shape: f32[2,16,4], index: 0, kind: input, shape index: {}]
  %s1 = inlined_call_operand.vmem [shape: f32[2,64], index: 1, kind: output, shape index: {}]
  $region1: #{tile.49} parent=0
    #allocation0 [shape = 'u8[4096]{0}', space=vmem, size = 0x1000, scoped, tag = 'scoped mem for output reshape']
    %s2 = smov 3
    %v3 = vld [vmem:[%s0] ss:$16 sm:%s2]
    %vm4 = vcmask 31744
    %5 = vst.msk [vmem:[#allocation0] sm:$0x3] %vm4, %v3
    %s6 = scalar_lea.vmem %s0, 15
    %s7 = smov 3
    %v8 = vld [vmem:[%s6] ss:$16 sm:%s7]
    %9 = vrot.lane.b32.xlu0 %v8, 60
    %v10 = vpop.permute.xlu0 %9
    %vm11 = vcmask 523744
    %12 = vst.msk [vmem:[#allocation0] sm:$0x3] %vm11, %v10
    %s13 = scalar_lea.vmem %s0, 14
    %s14 = smov 3
    %v15 = vld [vmem:[%s13] ss:$16 sm:%s14]
    %16 = vrot.lane.b32.xlu0 %v15, 56
    %v17 = vpop.permute.xlu0 %16
    %vm18 = vcmask 490944
    %19 = vst.msk [vmem:[#allocation0] sm:$0x3] %vm18, %v17
    %s20 = scalar_lea.vmem %s0, 13
    %s21 = smov 3
    %v22 = vld [vmem:[%s20] ss:$16 sm:%s21]
    %23 = vrot.lane.b32.xlu0 %v22, 52
    %v24 = vpop.permute.xlu0 %23
    %vm25 = vcmask 458144
    %26 = vst.msk [vmem:[#allocation0] sm:$0x3] %vm25, %v24
    %s27 = scalar_lea.vmem %s0, 12
    %s28 = smov 3
    %v29 = vld [vmem:[%s27] ss:$16 sm:%s28]
    %30 = vrot.lane.b32.xlu0 %v29, 48
    %v31 = vpop.permute.xlu0 %30
    %vm32 = vcmask 425344
    %33 = vst.msk [vmem:[#allocation0] sm:$0x3] %vm32, %v31
    %s34 = scalar_lea.vmem %s0, 11
    %s35 = smov 3
    %v36 = vld [vmem:[%s34] ss:$16 sm:%s35]
    %37 = vrot.lane.b32.xlu0 %v36, 44
    %v38 = vpop.permute.xlu0 %37
    %vm39 = vcmask 392544
    %40 = vst.msk [vmem:[#allocation0] sm:$0x3] %vm39, %v38
    %s41 = scalar_lea.vmem %s0, 10
    %s42 = smov 3
    %v43 = vld [vmem:[%s41] ss:$16 sm:%s42]
    %44 = vrot.lane.b32.xlu0 %v43, 40
    %v45 = vpop.permute.xlu0 %44
    %vm46 = vcmask 359744
    %47 = vst.msk [vmem:[#allocation0] sm:$0x3] %vm46, %v45
    %s48 = scalar_lea.vmem %s0, 9
    %s49 = smov 3
    %v50 = vld [vmem:[%s48] ss:$16 sm:%s49]
    %51 = vrot.lane.b32.xlu0 %v50, 36
    %v52 = vpop.permute.xlu0 %51
    %vm53 = vcmask 326944
    %54 = vst.msk [vmem:[#allocation0] sm:$0x3] %vm53, %v52
    %s55 = scalar_lea.vmem %s0, 8
    %s56 = smov 3
    %v57 = vld [vmem:[%s55] ss:$16 sm:%s56]
    %58 = vrot.lane.b32.xlu0 %v57, 32
    %v59 = vpop.permute.xlu0 %58
    %vm60 = vcmask 294144
    %61 = vst.msk [vmem:[#allocation0] sm:$0x3] %vm60, %v59
    %s62 = scalar_lea.vmem %s0, 7
    %s63 = smov 3
    %v64 = vld [vmem:[%s62] ss:$16 sm:%s63]
    %65 = vrot.lane.b32.xlu0 %v64, 28
    %v66 = vpop.permute.xlu0 %65
    %vm67 = vcmask 261344
    %68 = vst.msk [vmem:[#allocation0] sm:$0x3] %vm67, %v66
    %s69 = scalar_lea.vmem %s0, 6
    %s70 = smov 3
    %v71 = vld [vmem:[%s69] ss:$16 sm:%s70]
    %72 = vrot.lane.b32.xlu0 %v71, 24
    %v73 = vpop.permute.xlu0 %72
    %vm74 = vcmask 228544
    %75 = vst.msk [vmem:[#allocation0] sm:$0x3] %vm74, %v73
    %s76 = scalar_lea.vmem %s0, 5
    %s77 = smov 3
    %v78 = vld [vmem:[%s76] ss:$16 sm:%s77]
    %79 = vrot.lane.b32.xlu0 %v78, 20
    %v80 = vpop.permute.xlu0 %79
    %vm81 = vcmask 195744
    %82 = vst.msk [vmem:[#allocation0] sm:$0x3] %vm81, %v80
    %s83 = scalar_lea.vmem %s0, 4
    %s84 = smov 3
    %v85 = vld [vmem:[%s83] ss:$16 sm:%s84]
    %86 = vrot.lane.b32.xlu0 %v85, 16
    %v87 = vpop.permute.xlu0 %86
    %vm88 = vcmask 162944
    %89 = vst.msk [vmem:[#allocation0] sm:$0x3] %vm88, %v87
    %s90 = scalar_lea.vmem %s0, 3
    %s91 = smov 3
    %v92 = vld [vmem:[%s90] ss:$16 sm:%s91]
    %93 = vrot.lane.b32.xlu0 %v92, 12
    %v94 = vpop.permute.xlu0 %93
    %vm95 = vcmask 130144
    %96 = vst.msk [vmem:[#allocation0] sm:$0x3] %vm95, %v94
    %s97 = scalar_lea.vmem %s0, 2
    %s98 = smov 3
    %v99 = vld [vmem:[%s97] ss:$16 sm:%s98]
    %100 = vrot.lane.b32.xlu0 %v99, 8
    %v101 = vpop.permute.xlu0 %100
    %vm102 = vcmask 97344
    %103 = vst.msk [vmem:[#allocation0] sm:$0x3] %vm102, %v101
    %s104 = scalar_lea.vmem %s0, 1
    %s105 = smov 3
    %v106 = vld [vmem:[%s104] ss:$16 sm:%s105]
    %107 = vrot.lane.b32.xlu0 %v106, 4
    %v108 = vpop.permute.xlu0 %107
    %vm109 = vcmask 64544
    %110 = vst.msk [vmem:[#allocation0] sm:$0x3] %vm109, %v108
    %s112 = sshll.u32 1, 2
    %s113 = ssub.s32 %s112, 1
    %v115 = vld [vmem:[#allocation0] sm:%s113]
    %s116 = sshll.u32 1, 2
    %s117 = ssub.s32 %s116, 1
    %118 = vst [vmem:[%s1] sm:%s117] %v115

// kernel: preact_resblock_forward.1
$region0: #{preact_resblock_forward.1}
  #allocation0 [shape = 'u32[]', space=smem, size = 0x4, offset = 0x4, fixed_abs, tag = 'smem constant byte address 0x4 - core index']
  #allocation1 [shape = 'u32[144,128]{1,0:T(1,128)}', space=vmem, size = 0x12000, scoped, tag = 'internal scratch']
  %s0 = inlined_call_operand.vmem [shape: f32[32,64], index: 0, kind: input, shape index: {}]
  %s1 = inlined_call_operand.vmem [shape: f32[2,64], index: 1, kind: input, shape index: {}]
  %s2 = inlined_call_operand.vmem [shape: f32[2,128], index: 2, kind: input, shape index: {}]
  %s3 = inlined_call_operand.vmem [shape: f32[1,64], index: 3, kind: input, shape index: {}]
  %s4 = inlined_call_operand.vmem [shape: f32[1,64], index: 4, kind: input, shape index: {}]
  %s5 = inlined_call_operand.vmem [shape: f32[1,128], index: 5, kind: input, shape index: {}]
  %s6 = inlined_call_operand.vmem [shape: f32[1,128], index: 6, kind: input, shape index: {}]
  %s7 = inlined_call_operand.vmem [shape: f32[64,64], index: 7, kind: input, shape index: {}]
  %s8 = inlined_call_operand.vmem [shape: f32[128,128], index: 8, kind: input, shape index: {}]
  %s9 = inlined_call_operand.vmem [shape: bf16[3,64,128], index: 9, kind: input, shape index: {}]
  %s10 = inlined_call_operand.vmem [shape: f32[1,128], index: 10, kind: input, shape index: {}]
  %s11 = inlined_call_operand.vmem [shape: bf16[3,128,128], index: 11, kind: input, shape index: {}]
  %s12 = inlined_call_operand.vmem [shape: f32[1,128], index: 12, kind: input, shape index: {}]
  %s13 = inlined_call_operand.vmem [shape: bf16[64,128], index: 13, kind: input, shape index: {}]
  %s14 = inlined_call_operand.vmem [shape: f32[1,128], index: 14, kind: input, shape index: {}]
  %s15 = inlined_call_operand.vmem [shape: f32[32,128], index: 15, kind: output, shape index: {}]
  %s16 = sld [smem:[#allocation0]]
  $region70: #{preact_resblock_forward.1} parent=0
    _
  %s18 = ssub.s32 1, %s16
  %s19 = scalar_select 0, %s18, %s16
  // Predicated region
  $region2: #{preact_resblock_forward.1} parent=0 // pred_check
    _
  $region3: #{preact_resblock_forward.1} parent=0 // pred_check_branch
    %21 = sbr.rel (0) target = $region5
  $region4: #{preact_resblock_forward.1} parent=0 // pred_region
    _
  $region5: #{preact_resblock_forward.1} parent=0 // pred_fallthru
    _
  // Predicated region
  $region6: #{preact_resblock_forward.1} parent=0 // pred_check
    _
  $region7: #{preact_resblock_forward.1} parent=0 // pred_check_branch
    %23 = sbr.rel (0) target = $region9
  $region8: #{preact_resblock_forward.1} parent=0 // pred_region
    _
  $region9: #{preact_resblock_forward.1} parent=0 // pred_fallthru
    _
  // Predicated region
  $region10: #{preact_resblock_forward.1} parent=0 // pred_check
    _
  $region11: #{preact_resblock_forward.1} parent=0 // pred_check_branch
    %25 = sbr.rel (0) target = $region13
  $region12: #{preact_resblock_forward.1} parent=0 // pred_region
    _
  $region13: #{preact_resblock_forward.1} parent=0 // pred_fallthru
    _
  // Predicated region
  $region14: #{preact_resblock_forward.1} parent=0 // pred_check
    _
  $region15: #{preact_resblock_forward.1} parent=0 // pred_check_branch
    %27 = sbr.rel (0) target = $region17
  $region16: #{preact_resblock_forward.1} parent=0 // pred_region
    _
  $region17: #{preact_resblock_forward.1} parent=0 // pred_fallthru
    _
  // Predicated region
  $region18: #{preact_resblock_forward.1} parent=0 // pred_check
    _
  $region19: #{preact_resblock_forward.1} parent=0 // pred_check_branch
    %29 = sbr.rel (0) target = $region21
  $region20: #{preact_resblock_forward.1} parent=0 // pred_region
    _
  $region21: #{preact_resblock_forward.1} parent=0 // pred_fallthru
    _
  // Predicated region
  $region22: #{preact_resblock_forward.1} parent=0 // pred_check
    _
  $region23: #{preact_resblock_forward.1} parent=0 // pred_check_branch
    %31 = sbr.rel (0) target = $region25
  $region24: #{preact_resblock_forward.1} parent=0 // pred_region
    _
  $region25: #{preact_resblock_forward.1} parent=0 // pred_fallthru
    _
  // Predicated region
  $region26: #{preact_resblock_forward.1} parent=0 // pred_check
    _
  $region27: #{preact_resblock_forward.1} parent=0 // pred_check_branch
    %33 = sbr.rel (0) target = $region29
  $region28: #{preact_resblock_forward.1} parent=0 // pred_region
    _
  $region29: #{preact_resblock_forward.1} parent=0 // pred_fallthru
    _
  // Predicated region
  $region30: #{preact_resblock_forward.1} parent=0 // pred_check
    _
  $region31: #{preact_resblock_forward.1} parent=0 // pred_check_branch
    %35 = sbr.rel (0) target = $region33
  $region32: #{preact_resblock_forward.1} parent=0 // pred_region
    _
  $region33: #{preact_resblock_forward.1} parent=0 // pred_fallthru
    _
  // Predicated region
  $region34: #{preact_resblock_forward.1} parent=0 // pred_check
    _
  $region35: #{preact_resblock_forward.1} parent=0 // pred_check_branch
    %37 = sbr.rel (0) target = $region37
  $region36: #{preact_resblock_forward.1} parent=0 // pred_region
    _
  $region37: #{preact_resblock_forward.1} parent=0 // pred_fallthru
    _
  // Predicated region
  $region38: #{preact_resblock_forward.1} parent=0 // pred_check
    _
  $region39: #{preact_resblock_forward.1} parent=0 // pred_check_branch
    %39 = sbr.rel (0) target = $region41
  $region40: #{preact_resblock_forward.1} parent=0 // pred_region
    _
  $region41: #{preact_resblock_forward.1} parent=0 // pred_fallthru
    _
  // Predicated region
  $region42: #{preact_resblock_forward.1} parent=0 // pred_check
    _
  $region43: #{preact_resblock_forward.1} parent=0 // pred_check_branch
    %41 = sbr.rel (0) target = $region45
  $region44: #{preact_resblock_forward.1} parent=0 // pred_region
    _
  $region45: #{preact_resblock_forward.1} parent=0 // pred_fallthru
    _
  // Predicated region
  $region46: #{preact_resblock_forward.1} parent=0 // pred_check
    _
  $region47: #{preact_resblock_forward.1} parent=0 // pred_check_branch
    %43 = sbr.rel (0) target = $region49
  $region48: #{preact_resblock_forward.1} parent=0 // pred_region
    _
  $region49: #{preact_resblock_forward.1} parent=0 // pred_fallthru
    _
  // Predicated region
  $region50: #{preact_resblock_forward.1} parent=0 // pred_check
    _
  $region51: #{preact_resblock_forward.1} parent=0 // pred_check_branch
    %45 = sbr.rel (0) target = $region53
  $region52: #{preact_resblock_forward.1} parent=0 // pred_region
    _
  $region53: #{preact_resblock_forward.1} parent=0 // pred_fallthru
    _
  // Predicated region
  $region54: #{preact_resblock_forward.1} parent=0 // pred_check
    _
  $region55: #{preact_resblock_forward.1} parent=0 // pred_check_branch
    %47 = sbr.rel (0) target = $region57
  $region56: #{preact_resblock_forward.1} parent=0 // pred_region
    _
  $region57: #{preact_resblock_forward.1} parent=0 // pred_fallthru
    _
  // Predicated region
  $region58: #{preact_resblock_forward.1} parent=0 // pred_check
    _
  $region59: #{preact_resblock_forward.1} parent=0 // pred_check_branch
    %49 = sbr.rel (0) target = $region61
  $region60: #{preact_resblock_forward.1} parent=0 // pred_region
    _
  $region61: #{preact_resblock_forward.1} parent=0 // pred_fallthru
    _
  %v51 = vld [vmem:[%s0] sm:$0xff]
  %v52 = vld [vmem:[%s0 + $0x8] sm:$0xff]
  %v53 = vld [vmem:[%s0 + $0x10] sm:$0xff]
  %v54 = vld [vmem:[%s0 + $0x18] sm:$0xff]
  %v55 = vpack.c.bf16 %v52, %v51
  %v56 = vpack.c.bf16 %v54, %v53
  %v57 = vld [vmem:[%s13] sm:$0xf]
  %v58 = vld [vmem:[%s13 + $0x4] sm:$0xf]
  %v59 = vld [vmem:[%s13 + $0x8] sm:$0xf]
  %v60 = vld [vmem:[%s13 + $0xc] sm:$0xf]
  %v61 = vld [vmem:[%s13 + $0x10] sm:$0xf]
  %v62 = vld [vmem:[%s13 + $0x14] sm:$0xf]
  %v63 = vld [vmem:[%s13 + $0x18] sm:$0xf]
  %v64 = vld [vmem:[%s13 + $0x1c] sm:$0xf]
  %v65 = vld [vmem:[%s14] sm:$0x1]
  %v67 = vlaneseq
  %v68 = vshrl.u32 %v67, 7
  %v69 = vsub.s32 0, %v68
  %v70 = vrot.slane %v65, %v69
  %v80 = vunpack.c.l.b16 %v57
  %v81 = vunpack.c.l.b16 %v58
  %v82 = vunpack.c.l.b16 %v59
  %v83 = vunpack.c.l.b16 %v60
  %v84 = vunpack.c.l.b16 %v61
  %v85 = vunpack.c.l.b16 %v62
  %v86 = vunpack.c.l.b16 %v63
  %v87 = vunpack.c.l.b16 %v64
  %v88 = vpack.c.b16 %v81, %v80
  %v89 = vpack.c.b16 %v83, %v82
  %v90 = vpack.c.b16 %v85, %v84
  %v91 = vpack.c.b16 %v87, %v86
  %vm96 = vcmask 523264
  %v98 = vsel %vm96, %v55, 0
  %v101 = vsel %vm96, %v56, 0
  %103 = vmatprep.subr.bf16.mxu0 0
  %104 = vmatpush1.bf16.msra.mxu0 0
  %105 = vmatprep.subr.bf16.mxu0 0
  %106 = vmatpush1.bf16.msra.mxu0 0
  %107 = vmatprep.subr.bf16.mxu0 0
  %108 = vmatpush1.bf16.msra.mxu0 0
  %109 = vmatprep.subr.bf16.mxu0 0
  %110 = vmatpush1.bf16.msra.mxu0 0
  %111 = vmatprep.subr.bf16.mxu0 0
  %112 = vmatpush1.bf16.msra.mxu0 %v91
  %113 = vmatprep.subr.bf16.mxu0 0
  %114 = vmatpush1.bf16.msra.mxu0 %v90
  %115 = vmatprep.subr.bf16.mxu0 0
  %116 = vmatpush1.bf16.msra.mxu0 %v89
  %117 = vmatprep.subr.bf16.mxu0 0
  %118 = vmatpush1.bf16.msra.mxu0 %v88
  %119 = vmatprep.subr.bf16.mxu0 0
  %120 = vmatpush2.bf16.msra.mxu0 0
  %121 = vmatprep.subr.bf16.mxu0 0
  %122 = vmatpush2.bf16.msra.mxu0 0
  %123 = vmatprep.subr.bf16.mxu0 0
  %124 = vmatpush2.bf16.msra.mxu0 0
  %125 = vmatprep.subr.bf16.mxu0 0
  %126 = vmatpush2.bf16.msra.mxu0 0
  %127 = vmatprep.subr.bf16.mxu0 0
  %128 = vmatpush2.bf16.msra.mxu0 0
  %129 = vmatprep.subr.bf16.mxu0 0
  %130 = vmatpush2.bf16.msra.mxu0 0
  %131 = vmatprep.subr.bf16.mxu0 0
  %132 = vmatpush2.bf16.msra.mxu0 0
  %133 = vmatprep.subr.bf16.mxu0 0
  %134 = vmatpush2.bf16.msra.mxu0 0
  %135 = vmatprep.mubr.bf16.mxu0 0
  %136 = vmatmul.mubr.bf16.gmra.mxu0 %v98
  %v137 = vpop.f32.mrf.mxu0
  %v138 = vadd.f32 %v70, %v137
  %v139 = vpop.f32.mrf.mxu0
  %v140 = vpop.f32.mrf.mxu0
  %v141 = vadd.f32 %v70, %v140
  %v142 = vpop.f32.mrf.mxu0
  %143 = vmatprep.mubr.bf16.mxu0 0
  %144 = vmatmul.mubr.bf16.gmra.mxu0 %v101
  %v145 = vpop.f32.mrf.mxu0
  %v146 = vadd.f32 %v70, %v145
  %v147 = vpop.f32.mrf.mxu0
  %v148 = vpop.f32.mrf.mxu0
  %v149 = vadd.f32 %v70, %v148
  %v150 = vpop.f32.mrf.mxu0
  %151 = vdwg.mxu0
  %v152 = vld [vmem:[%s1] sm:$0x3]
  %v153 = vld [vmem:[%s3] sm:$0x1]
  %v154 = vld [vmem:[%s4] sm:$0x1]
  %v155 = vsel %vm96, %v51, 0.0
  %v156 = vsel %vm96, %v52, 0.0
  %v157 = vadd.f32 %v155, %v156
  %v158 = vsel %vm96, %v53, 0.0
  %v159 = vadd.f32 %v157, %v158
  %v160 = vsel %vm96, %v54, 0.0
  %v161 = vadd.f32 %v159, %v160
  %v162 = vrot.slane %v161, 4
  %v163 = vadd.f32 %v161, %v162
  %v164 = vrot.slane %v163, 2
  %v165 = vadd.f32 %v163, %v164
  %v166 = vrot.slane %v165, 1
  %v167 = vadd.f32 %v165, %v166
  %v168 = vmul.f32 %v51, %v51
  %v169 = vmul.f32 %v52, %v52
  %v170 = vmul.f32 %v53, %v53
  %v171 = vmul.f32 %v54, %v54
  %v172 = vsel %vm96, %v168, 0.0
  %v173 = vsel %vm96, %v169, 0.0
  %v174 = vadd.f32 %v172, %v173
  %v175 = vsel %vm96, %v170, 0.0
  %v176 = vadd.f32 %v174, %v175
  %v177 = vsel %vm96, %v171, 0.0
  %v178 = vadd.f32 %v176, %v177
  %v179 = vrot.slane %v178, 4
  %v180 = vadd.f32 %v178, %v179
  %v181 = vrot.slane %v180, 2
  %v182 = vadd.f32 %v180, %v181
  %v183 = vrot.slane %v182, 1
  %v184 = vadd.f32 %v182, %v183
  %v185 = vld [vmem:[%s7] sm:$0xff]
  %v186 = vld [vmem:[%s7 + $0x8] sm:$0xff]
  %v187 = vld [vmem:[%s7 + $0x10] sm:$0xff]
  %v188 = vld [vmem:[%s7 + $0x18] sm:$0xff]
  %v189 = vld [vmem:[%s7 + $0x20] sm:$0xff]
  %v190 = vld [vmem:[%s7 + $0x28] sm:$0xff]
  %v191 = vld [vmem:[%s7 + $0x30] sm:$0xff]
  %v192 = vld [vmem:[%s7 + $0x38] sm:$0xff]
  %v194 = vsel %vm96, %v167, 0
  %196 = vmatprep.subr.mxu0 0.0
  %197 = vmatpush1.msra.mxu0 0.0
  %198 = vmatprep.subr.mxu0 0.0
  %199 = vmatpush1.msra.mxu0 0.0
  %200 = vmatprep.subr.mxu0 0.0
  %201 = vmatpush1.msra.mxu0 0.0
  %202 = vmatprep.subr.mxu0 0.0
  %203 = vmatpush1.msra.mxu0 0.0
  %204 = vmatprep.subr.mxu0 0.0
  %205 = vmatpush1.msra.mxu0 0.0
  %206 = vmatprep.subr.mxu0 0.0
  %207 = vmatpush1.msra.mxu0 0.0
  %208 = vmatprep.subr.mxu0 0.0
  %209 = vmatpush1.msra.mxu0 0.0
  %210 = vmatprep.subr.mxu0 0.0
  %211 = vmatpush1.msra.mxu0 0.0
  %212 = vmatprep.subr.mxu0 0.0
  %213 = vmatpush1.msra.mxu0 %v192
  %214 = vmatprep.subr.mxu0 0.0
  %215 = vmatpush1.msra.mxu0 %v191
  %216 = vmatprep.subr.mxu0 0.0
  %217 = vmatpush1.msra.mxu0 %v190
  %218 = vmatprep.subr.mxu0 0.0
  %219 = vmatpush1.msra.mxu0 %v189
  %220 = vmatprep.subr.mxu0 0.0
  %221 = vmatpush1.msra.mxu0 %v188
  %222 = vmatprep.subr.mxu0 0.0
  %223 = vmatpush1.msra.mxu0 %v187
  %224 = vmatprep.subr.mxu0 0.0
  %225 = vmatpush1.msra.mxu0 %v186
  %226 = vmatprep.subr.mxu0 0.0
  %227 = vmatpush1.msra.mxu0 %v185
  %228 = vmatprep.subr.mxu0 0.0
  %229 = vmatpush2.msra.mxu0 0.0
  %230 = vmatprep.subr.mxu0 0.0
  %231 = vmatpush2.msra.mxu0 0.0
  %232 = vmatprep.subr.mxu0 0.0
  %233 = vmatpush2.msra.mxu0 0.0
  %234 = vmatprep.subr.mxu0 0.0
  %235 = vmatpush2.msra.mxu0 0.0
  %236 = vmatprep.subr.mxu0 0.0
  %237 = vmatpush2.msra.mxu0 0.0
  %238 = vmatprep.subr.mxu0 0.0
  %239 = vmatpush2.msra.mxu0 0.0
  %240 = vmatprep.subr.mxu0 0.0
  %241 = vmatpush2.msra.mxu0 0.0
  %242 = vmatprep.subr.mxu0 0.0
  %243 = vmatpush2.msra.mxu0 0.0
  %244 = vmatprep.subr.mxu0 0.0
  %245 = vmatpush2.msra.mxu0 0.0
  %246 = vmatprep.subr.mxu0 0.0
  %247 = vmatpush2.msra.mxu0 0.0
  %248 = vmatprep.subr.mxu0 0.0
  %249 = vmatpush2.msra.mxu0 0.0
  %250 = vmatprep.subr.mxu0 0.0
  %251 = vmatpush2.msra.mxu0 0.0
  %252 = vmatprep.subr.mxu0 0.0
  %253 = vmatpush2.msra.mxu0 0.0
  %254 = vmatprep.subr.mxu0 0.0
  %255 = vmatpush2.msra.mxu0 0.0
  %256 = vmatprep.subr.mxu0 0.0
  %257 = vmatpush2.msra.mxu0 0.0
  %258 = vmatprep.subr.mxu0 0.0
  %259 = vmatpush2.msra.mxu0 0.0
  %260 = vmatprep.mubr.f32.mxu0 0.0
  %261 = vmatmul.mubr.f32.gmra.mxu0 %v194
  %v262 = vpop.f32.mrf.mxu0
  %v263 = vadd.f32 0.0, %v262
  %v264 = vpop.f32.mrf.mxu0
  %265 = vdwg.mxu0
  %v266 = vmul.f32 %v263, 0.001953125
  %v268 = vsel %vm96, %v184, 0
  %270 = vmatprep.subr.mxu0 0.0
  %271 = vmatpush1.msra.mxu0 0.0
  %272 = vmatprep.subr.mxu0 0.0
  %273 = vmatpush1.msra.mxu0 0.0
  %274 = vmatprep.subr.mxu0 0.0
  %275 = vmatpush1.msra.mxu0 0.0
  %276 = vmatprep.subr.mxu0 0.0
  %277 = vmatpush1.msra.mxu0 0.0
  %278 = vmatprep.subr.mxu0 0.0
  %279 = vmatpush1.msra.mxu0 0.0
  %280 = vmatprep.subr.mxu0 0.0
  %281 = vmatpush1.msra.mxu0 0.0
  %282 = vmatprep.subr.mxu0 0.0
  %283 = vmatpush1.msra.mxu0 0.0
  %284 = vmatprep.subr.mxu0 0.0
  %285 = vmatpush1.msra.mxu0 0.0
  %286 = vmatprep.subr.mxu0 0.0
  %287 = vmatpush1.msra.mxu0 %v192
  %288 = vmatprep.subr.mxu0 0.0
  %289 = vmatpush1.msra.mxu0 %v191
  %290 = vmatprep.subr.mxu0 0.0
  %291 = vmatpush1.msra.mxu0 %v190
  %292 = vmatprep.subr.mxu0 0.0
  %293 = vmatpush1.msra.mxu0 %v189
  %294 = vmatprep.subr.mxu0 0.0
  %295 = vmatpush1.msra.mxu0 %v188
  %296 = vmatprep.subr.mxu0 0.0
  %297 = vmatpush1.msra.mxu0 %v187
  %298 = vmatprep.subr.mxu0 0.0
  %299 = vmatpush1.msra.mxu0 %v186
  %300 = vmatprep.subr.mxu0 0.0
  %301 = vmatpush1.msra.mxu0 %v185
  %302 = vmatprep.subr.mxu0 0.0
  %303 = vmatpush2.msra.mxu0 0.0
  %304 = vmatprep.subr.mxu0 0.0
  %305 = vmatpush2.msra.mxu0 0.0
  %306 = vmatprep.subr.mxu0 0.0
  %307 = vmatpush2.msra.mxu0 0.0
  %308 = vmatprep.subr.mxu0 0.0
  %309 = vmatpush2.msra.mxu0 0.0
  %310 = vmatprep.subr.mxu0 0.0
  %311 = vmatpush2.msra.mxu0 0.0
  %312 = vmatprep.subr.mxu0 0.0
  %313 = vmatpush2.msra.mxu0 0.0
  %314 = vmatprep.subr.mxu0 0.0
  %315 = vmatpush2.msra.mxu0 0.0
  %316 = vmatprep.subr.mxu0 0.0
  %317 = vmatpush2.msra.mxu0 0.0
  %318 = vmatprep.subr.mxu0 0.0
  %319 = vmatpush2.msra.mxu0 0.0
  %320 = vmatprep.subr.mxu0 0.0
  %321 = vmatpush2.msra.mxu0 0.0
  %322 = vmatprep.subr.mxu0 0.0
  %323 = vmatpush2.msra.mxu0 0.0
  %324 = vmatprep.subr.mxu0 0.0
  %325 = vmatpush2.msra.mxu0 0.0
  %326 = vmatprep.subr.mxu0 0.0
  %327 = vmatpush2.msra.mxu0 0.0
  %328 = vmatprep.subr.mxu0 0.0
  %329 = vmatpush2.msra.mxu0 0.0
  %330 = vmatprep.subr.mxu0 0.0
  %331 = vmatpush2.msra.mxu0 0.0
  %332 = vmatprep.subr.mxu0 0.0
  %333 = vmatpush2.msra.mxu0 0.0
  %334 = vmatprep.mubr.f32.mxu0 0.0
  %335 = vmatmul.mubr.f32.gmra.mxu0 %v268
  %v336 = vpop.f32.mrf.mxu0
  %v337 = vadd.f32 0.0, %v336
  %v338 = vpop.f32.mrf.mxu0
  %339 = vdwg.mxu0
  %v340 = vmul.f32 %v337, 0.001953125
  %v341 = vmul.f32 %v266, %v266
  %v342 = vsub.f32 %v340, %v341
  %v343 = vadd.f32 %v342, 1e-05
  %v344 = vrsqrt.pop %v343
  %v345 = vmul.f32 %v153, %v344
  %v347 = vlaneseq
  %v348 = vshrl.u32 %v347, 7
  %v349 = vsub.s32 0, %v348
  %v350 = vrot.slane %v345, %v349
  %v352 = vmul.f32 %v350, %v152
  %v353 = vmul.f32 %v266, %v345
  %v354 = vsub.f32 %v154, %v353
  %v356 = vlaneseq
  %v357 = vshrl.u32 %v356, 7
  %v358 = vsub.s32 0, %v357
  %v359 = vrot.slane %v354, %v358
  %v361 = vmul.f32 %v359, %v152
  %v364 = vunpack.c.l.s4 1966171168
  %v365 = vunpack.c.0.s8 %v364
  %v366 = vlaneseq
  %v367 = vshrl.u32 %v366, 7
  %v368 = vsub.s32 %v365, %v367
  %v369 = vrot.slane %v352, %v368
  %v370 = vcombine.high %v369, %v369
  %v372 = vunpack.c.l.s4 1966171168
  %v373 = vunpack.c.0.s8 %v372
  %v374 = vlaneseq
  %v375 = vshrl.u32 %v374, 7
  %v376 = vsub.s32 %v373, %v375
  %v377 = vrot.slane %v369, %v376
  %v379 = vunpack.c.l.s4 1966171168
  %v380 = vunpack.c.0.s8 %v379
  %v381 = vlaneseq
  %v382 = vshrl.u32 %v381, 7
  %v383 = vsub.s32 %v380, %v382
  %v384 = vrot.slane %v370, %v383
  %v385 = vlaneseq
  %v386 = vshrl.u32 %v385, 7
  %v387 = vsub.s32 0, %v386
  %v388 = vrot.slane %v377, %v387
  %v389 = vlaneseq
  %v390 = vshrl.u32 %v389, 7
  %v391 = vsub.s32 0, %v390
  %v392 = vrot.slane %v384, %v391
  %v395 = vmul.f32 %v51, %v388
  %v396 = vmul.f32 %v52, %v388
  %v397 = vmul.f32 %v53, %v392
  %v398 = vmul.f32 %v54, %v392
  %v401 = vunpack.c.l.s4 1966171168
  %v402 = vunpack.c.0.s8 %v401
  %v403 = vlaneseq
  %v404 = vshrl.u32 %v403, 7
  %v405 = vsub.s32 %v402, %v404
  %v406 = vrot.slane %v361, %v405
  %v407 = vcombine.high %v406, %v406
  %v409 = vunpack.c.l.s4 1966171168
  %v410 = vunpack.c.0.s8 %v409
  %v411 = vlaneseq
  %v412 = vshrl.u32 %v411, 7
  %v413 = vsub.s32 %v410, %v412
  %v414 = vrot.slane %v406, %v413
  %v416 = vunpack.c.l.s4 1966171168
  %v417 = vunpack.c.0.s8 %v416
  %v418 = vlaneseq
  %v419 = vshrl.u32 %v418, 7
  %v420 = vsub.s32 %v417, %v419
  %v421 = vrot.slane %v407, %v420
  %v422 = vlaneseq
  %v423 = vshrl.u32 %v422, 7
  %v424 = vsub.s32 0, %v423
  %v425 = vrot.slane %v414, %v424
  %v426 = vlaneseq
  %v427 = vshrl.u32 %v426, 7
  %v428 = vsub.s32 0, %v427
  %v429 = vrot.slane %v421, %v428
  %v432 = vadd.f32 %v395, %v425
  %v433 = vadd.f32 %v396, %v425
  %v434 = vadd.f32 %v397, %v429
  %v435 = vadd.f32 %v398, %v429
  %v436 = vmax.f32 %v432, 0.0
  %v437 = vmax.f32 %v433, 0.0
  %v438 = vmax.f32 %v434, 0.0
  %v439 = vmax.f32 %v435, 0.0
  %v440 = vld [vmem:[%s10] sm:$0x1]
  %v441 = vlaneseq
  %v442 = vshrl.u32 %v441, 7
  %v443 = vadd.s32 %v442, 8
  %v444 = vadd.s32 %v442, 16
  %v445 = vadd.s32 %v442, 24
  %vm450 = vcmask 1040384
  %v451 = vrot.slane %v436, 7
  %v452 = vrot.slane %v437, 7
  %v453 = vsel %vm450, %v451, %v452
  %v454 = vrot.slane %v438, 7
  %v455 = vsel %vm450, %v452, %v454
  %v456 = vrot.slane %v439, 7
  %v457 = vsel %vm450, %v454, %v456
  %v462 = vsel %vm450, 0.0, %v451
  %vm463 = vcmask 1046528
  %v464 = vrot.slane %v436, 1
  %v465 = vrot.slane %v437, 1
  %v466 = vsel %vm463, %v464, %v465
  %v467 = vrot.slane %v438, 1
  %v468 = vsel %vm463, %v465, %v467
  %v469 = vrot.slane %v439, 1
  %v470 = vsel %vm463, %v467, %v469
  %v475 = vsel %vm463, %v469, 0.0
  %vm476 = vcmp.lt.s32.totalorder %v442, 0
  %v477 = vsub.s32 0, %v442
  %v478 = vsel %vm476, %v477, %v442
  %v479 = vshrl.u32 %v478, 4
  %v480 = vand.u32 %v478, 15
  %v481 = vsub.s32 0, %v480
  %v482 = vsel %vm476, %v481, %v480
  %vm483 = vcmp.lt.s32.totalorder %v443, 0
  %v484 = vsub.s32 0, %v443
  %v485 = vsel %vm483, %v484, %v443
  %v486 = vshrl.u32 %v485, 4
  %v487 = vand.u32 %v485, 15
  %v488 = vsub.s32 0, %v487
  %v489 = vsel %vm483, %v488, %v487
  %vm490 = vcmp.lt.s32.totalorder %v444, 0
  %v491 = vsub.s32 0, %v444
  %v492 = vsel %vm490, %v491, %v444
  %v493 = vshrl.u32 %v492, 4
  %v494 = vand.u32 %v492, 15
  %v495 = vsub.s32 0, %v494
  %v496 = vsel %vm490, %v495, %v494
  %vm497 = vcmp.lt.s32.totalorder %v445, 0
  %v498 = vsub.s32 0, %v445
  %v499 = vsel %vm497, %v498, %v445
  %v500 = vshrl.u32 %v499, 4
  %v501 = vand.u32 %v499, 15
  %v502 = vsub.s32 0, %v501
  %v503 = vsel %vm497, %v502, %v501
  %vm504 = vcmp.ne.s32.totalorder %v482, 0
  %vm505 = vcmp.ne.s32.totalorder %v489, 0
  %vm506 = vcmp.ne.s32.totalorder %v496, 0
  %vm507 = vcmp.ne.s32.totalorder %v503, 0
  %vm508 = vcmp.lt.s32.totalorder %v482, 0
  %vm509 = vcmp.lt.s32.totalorder %v489, 0
  %vm510 = vcmp.lt.s32.totalorder %v496, 0
  %vm511 = vcmp.lt.s32.totalorder %v503, 0
  %vm512 = vmand %vm508, %vm504
  %vm513 = vmand %vm509, %vm505
  %vm514 = vmand %vm510, %vm506
  %vm515 = vmand %vm511, %vm507
  %v516 = vadd.s32 %v482, 16
  %v517 = vadd.s32 %v489, 16
  %v518 = vadd.s32 %v496, 16
  %v519 = vadd.s32 %v503, 16
  %v520 = vsel %vm512, %v516, %v482
  %v521 = vsel %vm513, %v517, %v489
  %v522 = vsel %vm514, %v518, %v496
  %v523 = vsel %vm515, %v519, %v503
  %vm524 = vcmp.eq.s32.totalorder %v520, 0
  %vm525 = vcmp.eq.s32.totalorder %v521, 0
  %vm526 = vcmp.eq.s32.totalorder %v522, 0
  %vm527 = vcmp.eq.s32.totalorder %v523, 0
  %v528 = vsel %vm524, 0.0, %v462
  %v529 = vsel %vm525, 0.0, %v453
  %v530 = vsel %vm526, 0.0, %v455
  %v531 = vsel %vm527, 0.0, %v457
  %vm532 = vcmp.eq.s32.totalorder %v520, 15
  %vm533 = vcmp.eq.s32.totalorder %v521, 15
  %vm534 = vcmp.eq.s32.totalorder %v522, 15
  %vm535 = vcmp.eq.s32.totalorder %v523, 15
  %v536 = vsel %vm532, 0.0, %v466
  %v537 = vsel %vm533, 0.0, %v468
  %v538 = vsel %vm534, 0.0, %v470
  %v539 = vsel %vm535, 0.0, %v475
  %v540 = vpack.c.bf16 %v437, %v436
  %v541 = vpack.c.bf16 %v439, %v438
  %s542 = scalar_lea.vmem %s9, 32
  %v543 = vld [vmem:[%s542] sm:$0xf]
  %v544 = vld [vmem:[%s542 + $0x4] sm:$0xf]
  %v545 = vld [vmem:[%s542 + $0x8] sm:$0xf]
  %v546 = vld [vmem:[%s542 + $0xc] sm:$0xf]
  %v547 = vld [vmem:[%s542 + $0x10] sm:$0xf]
  %v548 = vld [vmem:[%s542 + $0x14] sm:$0xf]
  %v549 = vld [vmem:[%s542 + $0x18] sm:$0xf]
  %v550 = vld [vmem:[%s542 + $0x1c] sm:$0xf]
  %v551 = vpack.c.bf16 %v529, %v528
  %v552 = vpack.c.bf16 %v531, %v530
  %v553 = vld [vmem:[%s9] sm:$0xf]
  %v554 = vld [vmem:[%s9 + $0x4] sm:$0xf]
  %v555 = vld [vmem:[%s9 + $0x8] sm:$0xf]
  %v556 = vld [vmem:[%s9 + $0xc] sm:$0xf]
  %v557 = vld [vmem:[%s9 + $0x10] sm:$0xf]
  %v558 = vld [vmem:[%s9 + $0x14] sm:$0xf]
  %v559 = vld [vmem:[%s9 + $0x18] sm:$0xf]
  %v560 = vld [vmem:[%s9 + $0x1c] sm:$0xf]
  %v569 = vunpack.c.l.b16 %v553
  %v570 = vunpack.c.l.b16 %v554
  %v571 = vunpack.c.l.b16 %v555
  %v572 = vunpack.c.l.b16 %v556
  %v573 = vunpack.c.l.b16 %v557
  %v574 = vunpack.c.l.b16 %v558
  %v575 = vunpack.c.l.b16 %v559
  %v576 = vunpack.c.l.b16 %v560
  %v577 = vpack.c.b16 %v570, %v569
  %v578 = vpack.c.b16 %v572, %v571
  %v579 = vpack.c.b16 %v574, %v573
  %v580 = vpack.c.b16 %v576, %v575
  %v586 = vsel %vm96, %v551, 0
  %v589 = vsel %vm96, %v552, 0
  %591 = vmatprep.subr.bf16.mxu0 0
  %592 = vmatpush1.bf16.msra.mxu0 0
  %593 = vmatprep.subr.bf16.mxu0 0
  %594 = vmatpush1.bf16.msra.mxu0 0
  %595 = vmatprep.subr.bf16.mxu0 0
  %596 = vmatpush1.bf16.msra.mxu0 0
  %597 = vmatprep.subr.bf16.mxu0 0
  %598 = vmatpush1.bf16.msra.mxu0 0
  %599 = vmatprep.subr.bf16.mxu0 0
  %600 = vmatpush1.bf16.msra.mxu0 %v580
  %601 = vmatprep.subr.bf16.mxu0 0
  %602 = vmatpush1.bf16.msra.mxu0 %v579
  %603 = vmatprep.subr.bf16.mxu0 0
  %604 = vmatpush1.bf16.msra.mxu0 %v578
  %605 = vmatprep.subr.bf16.mxu0 0
  %606 = vmatpush1.bf16.msra.mxu0 %v577
  %607 = vmatprep.subr.bf16.mxu0 0
  %608 = vmatpush2.bf16.msra.mxu0 0
  %609 = vmatprep.subr.bf16.mxu0 0
  %610 = vmatpush2.bf16.msra.mxu0 0
  %611 = vmatprep.subr.bf16.mxu0 0
  %612 = vmatpush2.bf16.msra.mxu0 0
  %613 = vmatprep.subr.bf16.mxu0 0
  %614 = vmatpush2.bf16.msra.mxu0 0
  %615 = vmatprep.subr.bf16.mxu0 0
  %616 = vmatpush2.bf16.msra.mxu0 0
  %617 = vmatprep.subr.bf16.mxu0 0
  %618 = vmatpush2.bf16.msra.mxu0 0
  %619 = vmatprep.subr.bf16.mxu0 0
  %620 = vmatpush2.bf16.msra.mxu0 0
  %621 = vmatprep.subr.bf16.mxu0 0
  %622 = vmatpush2.bf16.msra.mxu0 0
  %623 = vmatprep.mubr.bf16.mxu0 0
  %624 = vmatmul.mubr.bf16.gmra.mxu0 %v586
  %v625 = vpop.f32.mrf.mxu0
  %v626 = vadd.f32 0.0, %v625
  %v627 = vpop.f32.mrf.mxu0
  %v628 = vpop.f32.mrf.mxu0
  %v629 = vadd.f32 0.0, %v628
  %v630 = vpop.f32.mrf.mxu0
  %631 = vmatprep.mubr.bf16.mxu0 0
  %632 = vmatmul.mubr.bf16.gmra.mxu0 %v589
  %v633 = vpop.f32.mrf.mxu0
  %v634 = vadd.f32 0.0, %v633
  %v635 = vpop.f32.mrf.mxu0
  %v636 = vpop.f32.mrf.mxu0
  %v637 = vadd.f32 0.0, %v636
  %v638 = vpop.f32.mrf.mxu0
  %639 = vdwg.mxu0
  %v648 = vunpack.c.l.b16 %v543
  %v649 = vunpack.c.l.b16 %v544
  %v650 = vunpack.c.l.b16 %v545
  %v651 = vunpack.c.l.b16 %v546
  %v652 = vunpack.c.l.b16 %v547
  %v653 = vunpack.c.l.b16 %v548
  %v654 = vunpack.c.l.b16 %v549
  %v655 = vunpack.c.l.b16 %v550
  %v656 = vpack.c.b16 %v649, %v648
  %v657 = vpack.c.b16 %v651, %v650
  %v658 = vpack.c.b16 %v653, %v652
  %v659 = vpack.c.b16 %v655, %v654
  %v665 = vsel %vm96, %v540, 0
  %v668 = vsel %vm96, %v541, 0
  %670 = vmatprep.subr.bf16.mxu0 0
  %671 = vmatpush1.bf16.msra.mxu0 0
  %672 = vmatprep.subr.bf16.mxu0 0
  %673 = vmatpush1.bf16.msra.mxu0 0
  %674 = vmatprep.subr.bf16.mxu0 0
  %675 = vmatpush1.bf16.msra.mxu0 0
  %676 = vmatprep.subr.bf16.mxu0 0
  %677 = vmatpush1.bf16.msra.mxu0 0
  %678 = vmatprep.subr.bf16.mxu0 0
  %679 = vmatpush1.bf16.msra.mxu0 %v659
  %680 = vmatprep.subr.bf16.mxu0 0
  %681 = vmatpush1.bf16.msra.mxu0 %v658
  %682 = vmatprep.subr.bf16.mxu0 0
  %683 = vmatpush1.bf16.msra.mxu0 %v657
  %684 = vmatprep.subr.bf16.mxu0 0
  %685 = vmatpush1.bf16.msra.mxu0 %v656
  %686 = vmatprep.subr.bf16.mxu0 0
  %687 = vmatpush2.bf16.msra.mxu0 0
  %688 = vmatprep.subr.bf16.mxu0 0
  %689 = vmatpush2.bf16.msra.mxu0 0
  %690 = vmatprep.subr.bf16.mxu0 0
  %691 = vmatpush2.bf16.msra.mxu0 0
  %692 = vmatprep.subr.bf16.mxu0 0
  %693 = vmatpush2.bf16.msra.mxu0 0
  %694 = vmatprep.subr.bf16.mxu0 0
  %695 = vmatpush2.bf16.msra.mxu0 0
  %696 = vmatprep.subr.bf16.mxu0 0
  %697 = vmatpush2.bf16.msra.mxu0 0
  %698 = vmatprep.subr.bf16.mxu0 0
  %699 = vmatpush2.bf16.msra.mxu0 0
  %700 = vmatprep.subr.bf16.mxu0 0
  %701 = vmatpush2.bf16.msra.mxu0 0
  %702 = vmatprep.mubr.bf16.mxu0 0
  %703 = vmatmul.mubr.bf16.gmra.mxu0 %v665
  %v704 = vpop.f32.mrf.mxu0
  %v705 = vadd.f32 %v626, %v704
  %v706 = vpop.f32.mrf.mxu0
  %v707 = vpop.f32.mrf.mxu0
  %v708 = vadd.f32 %v629, %v707
  %v709 = vpop.f32.mrf.mxu0
  %710 = vmatprep.mubr.bf16.mxu0 0
  %711 = vmatmul.mubr.bf16.gmra.mxu0 %v668
  %v712 = vpop.f32.mrf.mxu0
  %v713 = vadd.f32 %v634, %v712
  %v714 = vpop.f32.mrf.mxu0
  %v715 = vpop.f32.mrf.mxu0
  %v716 = vadd.f32 %v637, %v715
  %v717 = vpop.f32.mrf.mxu0
  %718 = vdwg.mxu0
  %v719 = vpack.c.bf16 %v537, %v536
  %v720 = vpack.c.bf16 %v539, %v538
  %s721 = scalar_lea.vmem %s9, 64
  %v722 = vld [vmem:[%s721] sm:$0xf]
  %v723 = vld [vmem:[%s721 + $0x4] sm:$0xf]
  %v724 = vld [vmem:[%s721 + $0x8] sm:$0xf]
  %v725 = vld [vmem:[%s721 + $0xc] sm:$0xf]
  %v726 = vld [vmem:[%s721 + $0x10] sm:$0xf]
  %v727 = vld [vmem:[%s721 + $0x14] sm:$0xf]
  %v728 = vld [vmem:[%s721 + $0x18] sm:$0xf]
  %v729 = vld [vmem:[%s721 + $0x1c] sm:$0xf]
  %v738 = vunpack.c.l.b16 %v722
  %v739 = vunpack.c.l.b16 %v723
  %v740 = vunpack.c.l.b16 %v724
  %v741 = vunpack.c.l.b16 %v725
  %v742 = vunpack.c.l.b16 %v726
  %v743 = vunpack.c.l.b16 %v727
  %v744 = vunpack.c.l.b16 %v728
  %v745 = vunpack.c.l.b16 %v729
  %v746 = vpack.c.b16 %v739, %v738
  %v747 = vpack.c.b16 %v741, %v740
  %v748 = vpack.c.b16 %v743, %v742
  %v749 = vpack.c.b16 %v745, %v744
  %v755 = vsel %vm96, %v719, 0
  %v758 = vsel %vm96, %v720, 0
  %760 = vmatprep.subr.bf16.mxu0 0
  %761 = vmatpush1.bf16.msra.mxu0 0
  %762 = vmatprep.subr.bf16.mxu0 0
  %763 = vmatpush1.bf16.msra.mxu0 0
  %764 = vmatprep.subr.bf16.mxu0 0
  %765 = vmatpush1.bf16.msra.mxu0 0
  %766 = vmatprep.subr.bf16.mxu0 0
  %767 = vmatpush1.bf16.msra.mxu0 0
  %768 = vmatprep.subr.bf16.mxu0 0
  %769 = vmatpush1.bf16.msra.mxu0 %v749
  %770 = vmatprep.subr.bf16.mxu0 0
  %771 = vmatpush1.bf16.msra.mxu0 %v748
  %772 = vmatprep.subr.bf16.mxu0 0
  %773 = vmatpush1.bf16.msra.mxu0 %v747
  %774 = vmatprep.subr.bf16.mxu0 0
  %775 = vmatpush1.bf16.msra.mxu0 %v746
  %776 = vmatprep.subr.bf16.mxu0 0
  %777 = vmatpush2.bf16.msra.mxu0 0
  %778 = vmatprep.subr.bf16.mxu0 0
  %779 = vmatpush2.bf16.msra.mxu0 0
  %780 = vmatprep.subr.bf16.mxu0 0
  %781 = vmatpush2.bf16.msra.mxu0 0
  %782 = vmatprep.subr.bf16.mxu0 0
  %783 = vmatpush2.bf16.msra.mxu0 0
  %784 = vmatprep.subr.bf16.mxu0 0
  %785 = vmatpush2.bf16.msra.mxu0 0
  %786 = vmatprep.subr.bf16.mxu0 0
  %787 = vmatpush2.bf16.msra.mxu0 0
  %788 = vmatprep.subr.bf16.mxu0 0
  %789 = vmatpush2.bf16.msra.mxu0 0
  %790 = vmatprep.subr.bf16.mxu0 0
  %791 = vmatpush2.bf16.msra.mxu0 0
  %792 = vmatprep.mubr.bf16.mxu0 0
  %793 = vmatmul.mubr.bf16.gmra.mxu0 %v755
  %v794 = vpop.f32.mrf.mxu0
  %v795 = vadd.f32 0.0, %v794
  %v796 = vpop.f32.mrf.mxu0
  %v797 = vpop.f32.mrf.mxu0
  %v798 = vadd.f32 0.0, %v797
  %v799 = vpop.f32.mrf.mxu0
  %800 = vmatprep.mubr.bf16.mxu0 0
  %801 = vmatmul.mubr.bf16.gmra.mxu0 %v758
  %v802 = vpop.f32.mrf.mxu0
  %v803 = vadd.f32 0.0, %v802
  %v804 = vpop.f32.mrf.mxu0
  %v805 = vpop.f32.mrf.mxu0
  %v806 = vadd.f32 0.0, %v805
  %v807 = vpop.f32.mrf.mxu0
  %808 = vdwg.mxu0
  %v809 = vadd.f32 %v705, %v795
  %v810 = vadd.f32 %v708, %v798
  %v811 = vadd.f32 %v713, %v803
  %v812 = vadd.f32 %v716, %v806
  %v814 = vlaneseq
  %v815 = vshrl.u32 %v814, 7
  %v816 = vsub.s32 0, %v815
  %v817 = vrot.slane %v440, %v816
  %v819 = vadd.f32 %v809, %v817
  %v820 = vadd.f32 %v810, %v817
  %v821 = vadd.f32 %v811, %v817
  %v822 = vadd.f32 %v812, %v817
  %v823 = vld [vmem:[%s2] sm:$0x3]
  %v824 = vld [vmem:[%s5] sm:$0x1]
  %v825 = vld [vmem:[%s6] sm:$0x1]
  %v826 = vadd.f32 %v819, %v820
  %v827 = vadd.f32 %v826, %v821
  %v828 = vadd.f32 %v827, %v822
  %v829 = vrot.slane %v828, 4
  %v830 = vadd.f32 %v828, %v829
  %v831 = vrot.slane %v830, 2
  %v832 = vadd.f32 %v830, %v831
  %v833 = vrot.slane %v832, 1
  %v834 = vadd.f32 %v832, %v833
  %v835 = vmul.f32 %v819, %v819
  %v836 = vmul.f32 %v820, %v820
  %v837 = vmul.f32 %v821, %v821
  %v838 = vmul.f32 %v822, %v822
  %v839 = vadd.f32 %v835, %v836
  %v840 = vadd.f32 %v839, %v837
  %v841 = vadd.f32 %v840, %v838
  %v842 = vrot.slane %v841, 4
  %v843 = vadd.f32 %v841, %v842
  %v844 = vrot.slane %v843, 2
  %v845 = vadd.f32 %v843, %v844
  %v846 = vrot.slane %v845, 1
  %v847 = vadd.f32 %v845, %v846
  %v848 = vld [vmem:[%s8] sm:$0xff]
  %v849 = vld [vmem:[%s8 + $0x8] sm:$0xff]
  %v850 = vld [vmem:[%s8 + $0x10] sm:$0xff]
  %v851 = vld [vmem:[%s8 + $0x18] sm:$0xff]
  %v852 = vld [vmem:[%s8 + $0x20] sm:$0xff]
  %v853 = vld [vmem:[%s8 + $0x28] sm:$0xff]
  %v854 = vld [vmem:[%s8 + $0x30] sm:$0xff]
  %v855 = vld [vmem:[%s8 + $0x38] sm:$0xff]
  %v856 = vld [vmem:[%s8 + $0x40] sm:$0xff]
  %v857 = vld [vmem:[%s8 + $0x48] sm:$0xff]
  %v858 = vld [vmem:[%s8 + $0x50] sm:$0xff]
  %v859 = vld [vmem:[%s8 + $0x58] sm:$0xff]
  %v860 = vld [vmem:[%s8 + $0x60] sm:$0xff]
  %v861 = vld [vmem:[%s8 + $0x68] sm:$0xff]
  %v862 = vld [vmem:[%s8 + $0x70] sm:$0xff]
  %v863 = vld [vmem:[%s8 + $0x78] sm:$0xff]
  %864 = vmatprep.subr.mxu0 0.0
  %865 = vmatpush1.msra.mxu0 %v863
  %866 = vmatprep.subr.mxu0 0.0
  %867 = vmatpush1.msra.mxu0 %v862
  %868 = vmatprep.subr.mxu0 0.0
  %869 = vmatpush1.msra.mxu0 %v861
  %870 = vmatprep.subr.mxu0 0.0
  %871 = vmatpush1.msra.mxu0 %v860
  %872 = vmatprep.subr.mxu0 0.0
  %873 = vmatpush1.msra.mxu0 %v859
  %874 = vmatprep.subr.mxu0 0.0
  %875 = vmatpush1.msra.mxu0 %v858
  %876 = vmatprep.subr.mxu0 0.0
  %877 = vmatpush1.msra.mxu0 %v857
  %878 = vmatprep.subr.mxu0 0.0
  %879 = vmatpush1.msra.mxu0 %v856
  %880 = vmatprep.subr.mxu0 0.0
  %881 = vmatpush1.msra.mxu0 %v855
  %882 = vmatprep.subr.mxu0 0.0
  %883 = vmatpush1.msra.mxu0 %v854
  %884 = vmatprep.subr.mxu0 0.0
  %885 = vmatpush1.msra.mxu0 %v853
  %886 = vmatprep.subr.mxu0 0.0
  %887 = vmatpush1.msra.mxu0 %v852
  %888 = vmatprep.subr.mxu0 0.0
  %889 = vmatpush1.msra.mxu0 %v851
  %890 = vmatprep.subr.mxu0 0.0
  %891 = vmatpush1.msra.mxu0 %v850
  %892 = vmatprep.subr.mxu0 0.0
  %893 = vmatpush1.msra.mxu0 %v849
  %894 = vmatprep.subr.mxu0 0.0
  %895 = vmatpush1.msra.mxu0 %v848
  %896 = vmatprep.subr.mxu0 0.0
  %897 = vmatpush2.msra.mxu0 0.0
  %898 = vmatprep.subr.mxu0 0.0
  %899 = vmatpush2.msra.mxu0 0.0
  %900 = vmatprep.subr.mxu0 0.0
  %901 = vmatpush2.msra.mxu0 0.0
  %902 = vmatprep.subr.mxu0 0.0
  %903 = vmatpush2.msra.mxu0 0.0
  %904 = vmatprep.subr.mxu0 0.0
  %905 = vmatpush2.msra.mxu0 0.0
  %906 = vmatprep.subr.mxu0 0.0
  %907 = vmatpush2.msra.mxu0 0.0
  %908 = vmatprep.subr.mxu0 0.0
  %909 = vmatpush2.msra.mxu0 0.0
  %910 = vmatprep.subr.mxu0 0.0
  %911 = vmatpush2.msra.mxu0 0.0
  %912 = vmatprep.subr.mxu0 0.0
  %913 = vmatpush2.msra.mxu0 0.0
  %914 = vmatprep.subr.mxu0 0.0
  %915 = vmatpush2.msra.mxu0 0.0
  %916 = vmatprep.subr.mxu0 0.0
  %917 = vmatpush2.msra.mxu0 0.0
  %918 = vmatprep.subr.mxu0 0.0
  %919 = vmatpush2.msra.mxu0 0.0
  %920 = vmatprep.subr.mxu0 0.0
  %921 = vmatpush2.msra.mxu0 0.0
  %922 = vmatprep.subr.mxu0 0.0
  %923 = vmatpush2.msra.mxu0 0.0
  %924 = vmatprep.subr.mxu0 0.0
  %925 = vmatpush2.msra.mxu0 0.0
  %926 = vmatprep.subr.mxu0 0.0
  %927 = vmatpush2.msra.mxu0 0.0
  %928 = vmatprep.mubr.f32.mxu0 0.0
  %929 = vmatmul.mubr.f32.gmra.mxu0 %v834
  %v930 = vpop.f32.mrf.mxu0
  %v931 = vadd.f32 0.0, %v930
  %v932 = vpop.f32.mrf.mxu0
  %933 = vdwg.mxu0
  %v934 = vmul.f32 %v931, 0.001953125
  %935 = vmatprep.subr.mxu0 0.0
  %936 = vmatpush1.msra.mxu0 %v863
  %937 = vmatprep.subr.mxu0 0.0
  %938 = vmatpush1.msra.mxu0 %v862
  %939 = vmatprep.subr.mxu0 0.0
  %940 = vmatpush1.msra.mxu0 %v861
  %941 = vmatprep.subr.mxu0 0.0
  %942 = vmatpush1.msra.mxu0 %v860
  %943 = vmatprep.subr.mxu0 0.0
  %944 = vmatpush1.msra.mxu0 %v859
  %945 = vmatprep.subr.mxu0 0.0
  %946 = vmatpush1.msra.mxu0 %v858
  %947 = vmatprep.subr.mxu0 0.0
  %948 = vmatpush1.msra.mxu0 %v857
  %949 = vmatprep.subr.mxu0 0.0
  %950 = vmatpush1.msra.mxu0 %v856
  %951 = vmatprep.subr.mxu0 0.0
  %952 = vmatpush1.msra.mxu0 %v855
  %953 = vmatprep.subr.mxu0 0.0
  %954 = vmatpush1.msra.mxu0 %v854
  %955 = vmatprep.subr.mxu0 0.0
  %956 = vmatpush1.msra.mxu0 %v853
  %957 = vmatprep.subr.mxu0 0.0
  %958 = vmatpush1.msra.mxu0 %v852
  %959 = vmatprep.subr.mxu0 0.0
  %960 = vmatpush1.msra.mxu0 %v851
  %961 = vmatprep.subr.mxu0 0.0
  %962 = vmatpush1.msra.mxu0 %v850
  %963 = vmatprep.subr.mxu0 0.0
  %964 = vmatpush1.msra.mxu0 %v849
  %965 = vmatprep.subr.mxu0 0.0
  %966 = vmatpush1.msra.mxu0 %v848
  %967 = vmatprep.subr.mxu0 0.0
  %968 = vmatpush2.msra.mxu0 0.0
  %969 = vmatprep.subr.mxu0 0.0
  %970 = vmatpush2.msra.mxu0 0.0
  %971 = vmatprep.subr.mxu0 0.0
  %972 = vmatpush2.msra.mxu0 0.0
  %973 = vmatprep.subr.mxu0 0.0
  %974 = vmatpush2.msra.mxu0 0.0
  %975 = vmatprep.subr.mxu0 0.0
  %976 = vmatpush2.msra.mxu0 0.0
  %977 = vmatprep.subr.mxu0 0.0
  %978 = vmatpush2.msra.mxu0 0.0
  %979 = vmatprep.subr.mxu0 0.0
  %980 = vmatpush2.msra.mxu0 0.0
  %981 = vmatprep.subr.mxu0 0.0
  %982 = vmatpush2.msra.mxu0 0.0
  %983 = vmatprep.subr.mxu0 0.0
  %984 = vmatpush2.msra.mxu0 0.0
  %985 = vmatprep.subr.mxu0 0.0
  %986 = vmatpush2.msra.mxu0 0.0
  %987 = vmatprep.subr.mxu0 0.0
  %988 = vmatpush2.msra.mxu0 0.0
  %989 = vmatprep.subr.mxu0 0.0
  %990 = vmatpush2.msra.mxu0 0.0
  %991 = vmatprep.subr.mxu0 0.0
  %992 = vmatpush2.msra.mxu0 0.0
  %993 = vmatprep.subr.mxu0 0.0
  %994 = vmatpush2.msra.mxu0 0.0
  %995 = vmatprep.subr.mxu0 0.0
  %996 = vmatpush2.msra.mxu0 0.0
  %997 = vmatprep.subr.mxu0 0.0
  %998 = vmatpush2.msra.mxu0 0.0
  %999 = vmatprep.mubr.f32.mxu0 0.0
  %1000 = vmatmul.mubr.f32.gmra.mxu0 %v847
  %v1001 = vpop.f32.mrf.mxu0
  %v1002 = vadd.f32 0.0, %v1001
  %v1003 = vpop.f32.mrf.mxu0
  %1004 = vdwg.mxu0
  %v1005 = vmul.f32 %v1002, 0.001953125
  %v1006 = vmul.f32 %v934, %v934
  %v1007 = vsub.f32 %v1005, %v1006
  %v1008 = vadd.f32 %v1007, 1e-05
  %v1009 = vrsqrt.pop %v1008
  %v1010 = vmul.f32 %v824, %v1009
  %v1012 = vlaneseq
  %v1013 = vshrl.u32 %v1012, 7
  %v1014 = vsub.s32 0, %v1013
  %v1015 = vrot.slane %v1010, %v1014
  %v1017 = vmul.f32 %v1015, %v823
  %v1018 = vmul.f32 %v934, %v1010
  %v1019 = vsub.f32 %v825, %v1018
  %v1021 = vlaneseq
  %v1022 = vshrl.u32 %v1021, 7
  %v1023 = vsub.s32 0, %v1022
  %v1024 = vrot.slane %v1019, %v1023
  %v1026 = vmul.f32 %v1024, %v823
  %v1029 = vunpack.c.l.s4 1966171168
  %v1030 = vunpack.c.0.s8 %v1029
  %v1031 = vlaneseq
  %v1032 = vshrl.u32 %v1031, 7
  %v1033 = vsub.s32 %v1030, %v1032
  %v1034 = vrot.slane %v1017, %v1033
  %v1035 = vcombine.high %v1034, %v1034
  %v1037 = vunpack.c.l.s4 1966171168
  %v1038 = vunpack.c.0.s8 %v1037
  %v1039 = vlaneseq
  %v1040 = vshrl.u32 %v1039, 7
  %v1041 = vsub.s32 %v1038, %v1040
  %v1042 = vrot.slane %v1034, %v1041
  %v1044 = vunpack.c.l.s4 1966171168
  %v1045 = vunpack.c.0.s8 %v1044
  %v1046 = vlaneseq
  %v1047 = vshrl.u32 %v1046, 7
  %v1048 = vsub.s32 %v1045, %v1047
  %v1049 = vrot.slane %v1035, %v1048
  %v1050 = vlaneseq
  %v1051 = vshrl.u32 %v1050, 7
  %v1052 = vsub.s32 0, %v1051
  %v1053 = vrot.slane %v1042, %v1052
  %v1054 = vlaneseq
  %v1055 = vshrl.u32 %v1054, 7
  %v1056 = vsub.s32 0, %v1055
  %v1057 = vrot.slane %v1049, %v1056
  %v1060 = vmul.f32 %v819, %v1053
  %v1061 = vmul.f32 %v820, %v1053
  %v1062 = vmul.f32 %v821, %v1057
  %v1063 = vmul.f32 %v822, %v1057
  %v1066 = vunpack.c.l.s4 1966171168
  %v1067 = vunpack.c.0.s8 %v1066
  %v1068 = vlaneseq
  %v1069 = vshrl.u32 %v1068, 7
  %v1070 = vsub.s32 %v1067, %v1069
  %v1071 = vrot.slane %v1026, %v1070
  %v1072 = vcombine.high %v1071, %v1071
  %v1074 = vunpack.c.l.s4 1966171168
  %v1075 = vunpack.c.0.s8 %v1074
  %v1076 = vlaneseq
  %v1077 = vshrl.u32 %v1076, 7
  %v1078 = vsub.s32 %v1075, %v1077
  %v1079 = vrot.slane %v1071, %v1078
  %v1081 = vunpack.c.l.s4 1966171168
  %v1082 = vunpack.c.0.s8 %v1081
  %v1083 = vlaneseq
  %v1084 = vshrl.u32 %v1083, 7
  %v1085 = vsub.s32 %v1082, %v1084
  %v1086 = vrot.slane %v1072, %v1085
  %v1087 = vlaneseq
  %v1088 = vshrl.u32 %v1087, 7
  %v1089 = vsub.s32 0, %v1088
  %v1090 = vrot.slane %v1079, %v1089
  %v1091 = vlaneseq
  %v1092 = vshrl.u32 %v1091, 7
  %v1093 = vsub.s32 0, %v1092
  %v1094 = vrot.slane %v1086, %v1093
  %v1097 = vadd.f32 %v1060, %v1090
  %v1098 = vadd.f32 %v1061, %v1090
  %v1099 = vadd.f32 %v1062, %v1094
  %v1100 = vadd.f32 %v1063, %v1094
  %v1101 = vmax.f32 %v1097, 0.0
  %v1102 = vmax.f32 %v1098, 0.0
  %v1103 = vmax.f32 %v1099, 0.0
  %v1104 = vmax.f32 %v1100, 0.0
  %v1105 = vld [vmem:[%s12] sm:$0x1]
  %v1110 = vrot.slane %v1101, 7
  %v1111 = vrot.slane %v1102, 7
  %v1112 = vsel %vm450, %v1110, %v1111
  %v1113 = vrot.slane %v1103, 7
  %v1114 = vsel %vm450, %v1111, %v1113
  %v1115 = vrot.slane %v1104, 7
  %v1116 = vsel %vm450, %v1113, %v1115
  %v1121 = vsel %vm450, 0.0, %v1110
  %v1122 = vrot.slane %v1101, 1
  %v1123 = vrot.slane %v1102, 1
  %v1124 = vsel %vm463, %v1122, %v1123
  %v1125 = vrot.slane %v1103, 1
  %v1126 = vsel %vm463, %v1123, %v1125
  %v1127 = vrot.slane %v1104, 1
  %v1128 = vsel %vm463, %v1125, %v1127
  %v1133 = vsel %vm463, %v1127, 0.0
  %v1134 = vsel %vm524, 0.0, %v1121
  %v1135 = vsel %vm525, 0.0, %v1112
  %v1136 = vsel %vm526, 0.0, %v1114
  %v1137 = vsel %vm527, 0.0, %v1116
  %v1138 = vsel %vm532, 0.0, %v1124
  %v1139 = vsel %vm533, 0.0, %v1126
  %v1140 = vsel %vm534, 0.0, %v1128
  %v1141 = vsel %vm535, 0.0, %v1133
  %v1142 = vpack.c.bf16 %v1102, %v1101
  %v1143 = vpack.c.bf16 %v1104, %v1103
  %s1144 = scalar_lea.vmem %s11, 64
  %v1145 = vld [vmem:[%s1144] sm:$0xf]
  %v1146 = vld [vmem:[%s1144 + $0x4] sm:$0xf]
  %v1147 = vld [vmem:[%s1144 + $0x8] sm:$0xf]
  %v1148 = vld [vmem:[%s1144 + $0xc] sm:$0xf]
  %v1149 = vld [vmem:[%s1144 + $0x10] sm:$0xf]
  %v1150 = vld [vmem:[%s1144 + $0x14] sm:$0xf]
  %v1151 = vld [vmem:[%s1144 + $0x18] sm:$0xf]
  %v1152 = vld [vmem:[%s1144 + $0x1c] sm:$0xf]
  %v1153 = vld [vmem:[%s1144 + $0x20] sm:$0xf]
  %v1154 = vld [vmem:[%s1144 + $0x24] sm:$0xf]
  %v1155 = vld [vmem:[%s1144 + $0x28] sm:$0xf]
  %v1156 = vld [vmem:[%s1144 + $0x2c] sm:$0xf]
  %v1157 = vld [vmem:[%s1144 + $0x30] sm:$0xf]
  %v1158 = vld [vmem:[%s1144 + $0x34] sm:$0xf]
  %v1159 = vld [vmem:[%s1144 + $0x38] sm:$0xf]
  %v1160 = vld [vmem:[%s1144 + $0x3c] sm:$0xf]
  %v1161 = vpack.c.bf16 %v1135, %v1134
  %v1162 = vpack.c.bf16 %v1137, %v1136
  %v1163 = vld [vmem:[%s11] sm:$0xf]
  %v1164 = vld [vmem:[%s11 + $0x4] sm:$0xf]
  %v1165 = vld [vmem:[%s11 + $0x8] sm:$0xf]
  %v1166 = vld [vmem:[%s11 + $0xc] sm:$0xf]
  %v1167 = vld [vmem:[%s11 + $0x10] sm:$0xf]
  %v1168 = vld [vmem:[%s11 + $0x14] sm:$0xf]
  %v1169 = vld [vmem:[%s11 + $0x18] sm:$0xf]
  %v1170 = vld [vmem:[%s11 + $0x1c] sm:$0xf]
  %v1171 = vld [vmem:[%s11 + $0x20] sm:$0xf]
  %v1172 = vld [vmem:[%s11 + $0x24] sm:$0xf]
  %v1173 = vld [vmem:[%s11 + $0x28] sm:$0xf]
  %v1174 = vld [vmem:[%s11 + $0x2c] sm:$0xf]
  %v1175 = vld [vmem:[%s11 + $0x30] sm:$0xf]
  %v1176 = vld [vmem:[%s11 + $0x34] sm:$0xf]
  %v1177 = vld [vmem:[%s11 + $0x38] sm:$0xf]
  %v1178 = vld [vmem:[%s11 + $0x3c] sm:$0xf]
  %v1195 = vunpack.c.l.b16 %v1163
  %v1196 = vunpack.c.l.b16 %v1164
  %v1197 = vunpack.c.l.b16 %v1165
  %v1198 = vunpack.c.l.b16 %v1166
  %v1199 = vunpack.c.l.b16 %v1167
  %v1200 = vunpack.c.l.b16 %v1168
  %v1201 = vunpack.c.l.b16 %v1169
  %v1202 = vunpack.c.l.b16 %v1170
  %v1203 = vunpack.c.l.b16 %v1171
  %v1204 = vunpack.c.l.b16 %v1172
  %v1205 = vunpack.c.l.b16 %v1173
  %v1206 = vunpack.c.l.b16 %v1174
  %v1207 = vunpack.c.l.b16 %v1175
  %v1208 = vunpack.c.l.b16 %v1176
  %v1209 = vunpack.c.l.b16 %v1177
  %v1210 = vunpack.c.l.b16 %v1178
  %v1211 = vpack.c.b16 %v1196, %v1195
  %v1212 = vpack.c.b16 %v1198, %v1197
  %v1213 = vpack.c.b16 %v1200, %v1199
  %v1214 = vpack.c.b16 %v1202, %v1201
  %v1215 = vpack.c.b16 %v1204, %v1203
  %v1216 = vpack.c.b16 %v1206, %v1205
  %v1217 = vpack.c.b16 %v1208, %v1207
  %v1218 = vpack.c.b16 %v1210, %v1209
  %1227 = vmatprep.subr.bf16.mxu0 0
  %1228 = vmatpush1.bf16.msra.mxu0 %v1218
  %1229 = vmatprep.subr.bf16.mxu0 0
  %1230 = vmatpush1.bf16.msra.mxu0 %v1217
  %1231 = vmatprep.subr.bf16.mxu0 0
  %1232 = vmatpush1.bf16.msra.mxu0 %v1216
  %1233 = vmatprep.subr.bf16.mxu0 0
  %1234 = vmatpush1.bf16.msra.mxu0 %v1215
  %1235 = vmatprep.subr.bf16.mxu0 0
  %1236 = vmatpush1.bf16.msra.mxu0 %v1214
  %1237 = vmatprep.subr.bf16.mxu0 0
  %1238 = vmatpush1.bf16.msra.mxu0 %v1213
  %1239 = vmatprep.subr.bf16.mxu0 0
  %1240 = vmatpush1.bf16.msra.mxu0 %v1212
  %1241 = vmatprep.subr.bf16.mxu0 0
  %1242 = vmatpush1.bf16.msra.mxu0 %v1211
  %1243 = vmatprep.subr.bf16.mxu0 0
  %1244 = vmatpush2.bf16.msra.mxu0 0
  %1245 = vmatprep.subr.bf16.mxu0 0
  %1246 = vmatpush2.bf16.msra.mxu0 0
  %1247 = vmatprep.subr.bf16.mxu0 0
  %1248 = vmatpush2.bf16.msra.mxu0 0
  %1249 = vmatprep.subr.bf16.mxu0 0
  %1250 = vmatpush2.bf16.msra.mxu0 0
  %1251 = vmatprep.subr.bf16.mxu0 0
  %1252 = vmatpush2.bf16.msra.mxu0 0
  %1253 = vmatprep.subr.bf16.mxu0 0
  %1254 = vmatpush2.bf16.msra.mxu0 0
  %1255 = vmatprep.subr.bf16.mxu0 0
  %1256 = vmatpush2.bf16.msra.mxu0 0
  %1257 = vmatprep.subr.bf16.mxu0 0
  %1258 = vmatpush2.bf16.msra.mxu0 0
  %1259 = vmatprep.mubr.bf16.mxu0 0
  %1260 = vmatmul.mubr.bf16.gmra.mxu0 %v1161
  %v1261 = vpop.f32.mrf.mxu0
  %v1262 = vadd.f32 0.0, %v1261
  %v1263 = vpop.f32.mrf.mxu0
  %v1264 = vpop.f32.mrf.mxu0
  %v1265 = vadd.f32 0.0, %v1264
  %v1266 = vpop.f32.mrf.mxu0
  %1267 = vmatprep.mubr.bf16.mxu0 0
  %1268 = vmatmul.mubr.bf16.gmra.mxu0 %v1162
  %v1269 = vpop.f32.mrf.mxu0
  %v1270 = vadd.f32 0.0, %v1269
  %v1271 = vpop.f32.mrf.mxu0
  %v1272 = vpop.f32.mrf.mxu0
  %v1273 = vadd.f32 0.0, %v1272
  %v1274 = vpop.f32.mrf.mxu0
  %1275 = vdwg.mxu0
  %v1292 = vunpack.c.l.b16 %v1145
  %v1293 = vunpack.c.l.b16 %v1146
  %v1294 = vunpack.c.l.b16 %v1147
  %v1295 = vunpack.c.l.b16 %v1148
  %v1296 = vunpack.c.l.b16 %v1149
  %v1297 = vunpack.c.l.b16 %v1150
  %v1298 = vunpack.c.l.b16 %v1151
  %v1299 = vunpack.c.l.b16 %v1152
  %v1300 = vunpack.c.l.b16 %v1153
  %v1301 = vunpack.c.l.b16 %v1154
  %v1302 = vunpack.c.l.b16 %v1155
  %v1303 = vunpack.c.l.b16 %v1156
  %v1304 = vunpack.c.l.b16 %v1157
  %v1305 = vunpack.c.l.b16 %v1158
  %v1306 = vunpack.c.l.b16 %v1159
  %v1307 = vunpack.c.l.b16 %v1160
  %v1308 = vpack.c.b16 %v1293, %v1292
  %v1309 = vpack.c.b16 %v1295, %v1294
  %v1310 = vpack.c.b16 %v1297, %v1296
  %v1311 = vpack.c.b16 %v1299, %v1298
  %v1312 = vpack.c.b16 %v1301, %v1300
  %v1313 = vpack.c.b16 %v1303, %v1302
  %v1314 = vpack.c.b16 %v1305, %v1304
  %v1315 = vpack.c.b16 %v1307, %v1306
  %1324 = vmatprep.subr.bf16.mxu0 0
  %1325 = vmatpush1.bf16.msra.mxu0 %v1315
  %1326 = vmatprep.subr.bf16.mxu0 0
  %1327 = vmatpush1.bf16.msra.mxu0 %v1314
  %1328 = vmatprep.subr.bf16.mxu0 0
  %1329 = vmatpush1.bf16.msra.mxu0 %v1313
  %1330 = vmatprep.subr.bf16.mxu0 0
  %1331 = vmatpush1.bf16.msra.mxu0 %v1312
  %1332 = vmatprep.subr.bf16.mxu0 0
  %1333 = vmatpush1.bf16.msra.mxu0 %v1311
  %1334 = vmatprep.subr.bf16.mxu0 0
  %1335 = vmatpush1.bf16.msra.mxu0 %v1310
  %1336 = vmatprep.subr.bf16.mxu0 0
  %1337 = vmatpush1.bf16.msra.mxu0 %v1309
  %1338 = vmatprep.subr.bf16.mxu0 0
  %1339 = vmatpush1.bf16.msra.mxu0 %v1308
  %1340 = vmatprep.subr.bf16.mxu0 0
  %1341 = vmatpush2.bf16.msra.mxu0 0
  %1342 = vmatprep.subr.bf16.mxu0 0
  %1343 = vmatpush2.bf16.msra.mxu0 0
  %1344 = vmatprep.subr.bf16.mxu0 0
  %1345 = vmatpush2.bf16.msra.mxu0 0
  %1346 = vmatprep.subr.bf16.mxu0 0
  %1347 = vmatpush2.bf16.msra.mxu0 0
  %1348 = vmatprep.subr.bf16.mxu0 0
  %1349 = vmatpush2.bf16.msra.mxu0 0
  %1350 = vmatprep.subr.bf16.mxu0 0
  %1351 = vmatpush2.bf16.msra.mxu0 0
  %1352 = vmatprep.subr.bf16.mxu0 0
  %1353 = vmatpush2.bf16.msra.mxu0 0
  %1354 = vmatprep.subr.bf16.mxu0 0
  %1355 = vmatpush2.bf16.msra.mxu0 0
  %1356 = vmatprep.mubr.bf16.mxu0 0
  %1357 = vmatmul.mubr.bf16.gmra.mxu0 %v1142
  %v1358 = vpop.f32.mrf.mxu0
  %v1359 = vadd.f32 %v1262, %v1358
  %v1360 = vpop.f32.mrf.mxu0
  %v1361 = vpop.f32.mrf.mxu0
  %v1362 = vadd.f32 %v1265, %v1361
  %v1363 = vpop.f32.mrf.mxu0
  %1364 = vmatprep.mubr.bf16.mxu0 0
  %1365 = vmatmul.mubr.bf16.gmra.mxu0 %v1143
  %v1366 = vpop.f32.mrf.mxu0
  %v1367 = vadd.f32 %v1270, %v1366
  %v1368 = vpop.f32.mrf.mxu0
  %v1369 = vpop.f32.mrf.mxu0
  %v1370 = vadd.f32 %v1273, %v1369
  %v1371 = vpop.f32.mrf.mxu0
  %1372 = vdwg.mxu0
  %v1373 = vpack.c.bf16 %v1139, %v1138
  %v1374 = vpack.c.bf16 %v1141, %v1140
  %s1375 = scalar_lea.vmem %s11, 128
  %v1376 = vld [vmem:[%s1375] sm:$0xf]
  %v1377 = vld [vmem:[%s1375 + $0x4] sm:$0xf]
  %v1378 = vld [vmem:[%s1375 + $0x8] sm:$0xf]
  %v1379 = vld [vmem:[%s1375 + $0xc] sm:$0xf]
  %v1380 = vld [vmem:[%s1375 + $0x10] sm:$0xf]
  %v1381 = vld [vmem:[%s1375 + $0x14] sm:$0xf]
  %v1382 = vld [vmem:[%s1375 + $0x18] sm:$0xf]
  %v1383 = vld [vmem:[%s1375 + $0x1c] sm:$0xf]
  %v1384 = vld [vmem:[%s1375 + $0x20] sm:$0xf]
  %v1385 = vld [vmem:[%s1375 + $0x24] sm:$0xf]
  %v1386 = vld [vmem:[%s1375 + $0x28] sm:$0xf]
  %v1387 = vld [vmem:[%s1375 + $0x2c] sm:$0xf]
  %v1388 = vld [vmem:[%s1375 + $0x30] sm:$0xf]
  %v1389 = vld [vmem:[%s1375 + $0x34] sm:$0xf]
  %v1390 = vld [vmem:[%s1375 + $0x38] sm:$0xf]
  %v1391 = vld [vmem:[%s1375 + $0x3c] sm:$0xf]
  %v1408 = vunpack.c.l.b16 %v1376
  %v1409 = vunpack.c.l.b16 %v1377
  %v1410 = vunpack.c.l.b16 %v1378
  %v1411 = vunpack.c.l.b16 %v1379
  %v1412 = vunpack.c.l.b16 %v1380
  %v1413 = vunpack.c.l.b16 %v1381
  %v1414 = vunpack.c.l.b16 %v1382
  %v1415 = vunpack.c.l.b16 %v1383
  %v1416 = vunpack.c.l.b16 %v1384
  %v1417 = vunpack.c.l.b16 %v1385
  %v1418 = vunpack.c.l.b16 %v1386
  %v1419 = vunpack.c.l.b16 %v1387
  %v1420 = vunpack.c.l.b16 %v1388
  %v1421 = vunpack.c.l.b16 %v1389
  %v1422 = vunpack.c.l.b16 %v1390
  %v1423 = vunpack.c.l.b16 %v1391
  %v1424 = vpack.c.b16 %v1409, %v1408
  %v1425 = vpack.c.b16 %v1411, %v1410
  %v1426 = vpack.c.b16 %v1413, %v1412
  %v1427 = vpack.c.b16 %v1415, %v1414
  %v1428 = vpack.c.b16 %v1417, %v1416
  %v1429 = vpack.c.b16 %v1419, %v1418
  %v1430 = vpack.c.b16 %v1421, %v1420
  %v1431 = vpack.c.b16 %v1423, %v1422
  %1440 = vmatprep.subr.bf16.mxu0 0
  %1441 = vmatpush1.bf16.msra.mxu0 %v1431
  %1442 = vmatprep.subr.bf16.mxu0 0
  %1443 = vmatpush1.bf16.msra.mxu0 %v1430
  %1444 = vmatprep.subr.bf16.mxu0 0
  %1445 = vmatpush1.bf16.msra.mxu0 %v1429
  %1446 = vmatprep.subr.bf16.mxu0 0
  %1447 = vmatpush1.bf16.msra.mxu0 %v1428
  %1448 = vmatprep.subr.bf16.mxu0 0
  %1449 = vmatpush1.bf16.msra.mxu0 %v1427
  %1450 = vmatprep.subr.bf16.mxu0 0
  %1451 = vmatpush1.bf16.msra.mxu0 %v1426
  %1452 = vmatprep.subr.bf16.mxu0 0
  %1453 = vmatpush1.bf16.msra.mxu0 %v1425
  %1454 = vmatprep.subr.bf16.mxu0 0
  %1455 = vmatpush1.bf16.msra.mxu0 %v1424
  %1456 = vmatprep.subr.bf16.mxu0 0
  %1457 = vmatpush2.bf16.msra.mxu0 0
  %1458 = vmatprep.subr.bf16.mxu0 0
  %1459 = vmatpush2.bf16.msra.mxu0 0
  %1460 = vmatprep.subr.bf16.mxu0 0
  %1461 = vmatpush2.bf16.msra.mxu0 0
  %1462 = vmatprep.subr.bf16.mxu0 0
  %1463 = vmatpush2.bf16.msra.mxu0 0
  %1464 = vmatprep.subr.bf16.mxu0 0
  %1465 = vmatpush2.bf16.msra.mxu0 0
  %1466 = vmatprep.subr.bf16.mxu0 0
  %1467 = vmatpush2.bf16.msra.mxu0 0
  %1468 = vmatprep.subr.bf16.mxu0 0
  %1469 = vmatpush2.bf16.msra.mxu0 0
  %1470 = vmatprep.subr.bf16.mxu0 0
  %1471 = vmatpush2.bf16.msra.mxu0 0
  %1472 = vmatprep.mubr.bf16.mxu0 0
  %1473 = vmatmul.mubr.bf16.gmra.mxu0 %v1373
  %v1474 = vpop.f32.mrf.mxu0
  %v1475 = vadd.f32 0.0, %v1474
  %v1476 = vpop.f32.mrf.mxu0
  %v1477 = vpop.f32.mrf.mxu0
  %v1478 = vadd.f32 0.0, %v1477
  %v1479 = vpop.f32.mrf.mxu0
  %1480 = vmatprep.mubr.bf16.mxu0 0
  %1481 = vmatmul.mubr.bf16.gmra.mxu0 %v1374
  %v1482 = vpop.f32.mrf.mxu0
  %v1483 = vadd.f32 0.0, %v1482
  %v1484 = vpop.f32.mrf.mxu0
  %v1485 = vpop.f32.mrf.mxu0
  %v1486 = vadd.f32 0.0, %v1485
  %v1487 = vpop.f32.mrf.mxu0
  %1488 = vdwg.mxu0
  %v1489 = vadd.f32 %v1359, %v1475
  %v1490 = vadd.f32 %v1362, %v1478
  %v1491 = vadd.f32 %v1367, %v1483
  %v1492 = vadd.f32 %v1370, %v1486
  %v1494 = vlaneseq
  %v1495 = vshrl.u32 %v1494, 7
  %v1496 = vsub.s32 0, %v1495
  %v1497 = vrot.slane %v1105, %v1496
  %v1499 = vadd.f32 %v1489, %v1497
  %v1500 = vadd.f32 %v1490, %v1497
  %v1501 = vadd.f32 %v1491, %v1497
  %v1502 = vadd.f32 %v1492, %v1497
  %v1503 = vadd.f32 %v1499, %v138
  %v1504 = vadd.f32 %v1500, %v141
  %v1505 = vadd.f32 %v1501, %v146
  %v1506 = vadd.f32 %v1502, %v149
  %1507 = vst [vmem:[%s15] sm:$0xff] %v1503
  %1508 = vst [vmem:[%s15 + $0x8] sm:$0xff] %v1504
  %1509 = vst [vmem:[%s15 + $0x10] sm:$0xff] %v1505
  %1510 = vst [vmem:[%s15 + $0x18] sm:$0xff] %v1506
  // Predicated region
  $region62: #{preact_resblock_forward.1} parent=0 // pred_check
    _
  $region63: #{preact_resblock_forward.1} parent=0 // pred_check_branch
    %1512 = sbr.rel (0) target = $region65
  $region64: #{preact_resblock_forward.1} parent=0 // pred_region
    _
  $region65: #{preact_resblock_forward.1} parent=0 // pred_fallthru
    _
  // Predicated region
  $region66: #{preact_resblock_forward.1} parent=0 // pred_check
    _
  $region67: #{preact_resblock_forward.1} parent=0 // pred_check_branch
    %1514 = sbr.rel (0) target = $region69
  $region68: #{preact_resblock_forward.1} parent=0 // pred_region
    _
  $region69: #{preact_resblock_forward.1} parent=0 // pred_fallthru
    _

</llo_original>
